<compile_context>
chip_gen: v7x
topology: tpu7x:2x2x1
jax: 0.10.0
libtpu: 0.0.40
codegen_flags: <defaults>
</compile_context>

<pallas_src>
import functools

import jax
import jax.numpy as jnp
from jax.experimental import pallas as pl
from jax.experimental.pallas import tpu as pltpu


def _attn_lora_kernel(
    x_ref,       # (1, TQ, D)  this query tile's rows of x
    wqkv_ref,    # (D, 3H)     [Wq_eff*inv_sqrt_h | Wk | Wv_eff], compute dtype
    bqkv_ref,    # (1, 3H)     [bq*inv_sqrt_h | 0 | bv], f32
    wproj_ref,   # (H, H)      HF Conv1D c_proj weight ([in, out]), compute dtype
    bproj_ref,   # (1, H)      f32
    out_ref,     # (1, TQ, H)
    *rest,       # [weights_ref (1, TQ, S)], k_scr (S,H), v_scr (S,H), s_scr (TQ,S)
    seq, hidden, q_tile, emit_weights, compute_dtype,
):
    if emit_weights:
        weights_ref, k_scr, v_scr, s_scr = rest
    else:
        k_scr, v_scr, s_scr = rest

    H = hidden
    TQ = q_tile
    qi = pl.program_id(1)
    n_tiles = pl.num_programs(1)
    q0 = pl.multiple_of(qi * TQ, TQ)
    neg = jnp.finfo(jnp.float32).min

    # ---- 1. QKV projection for THIS tile's rows only (bf16 MXU, f32 acc) ----
    x = x_ref[0].astype(compute_dtype)                                  # (TQ, D)
    qkv = jnp.dot(x, wqkv_ref[...],
                  preferred_element_type=jnp.float32) + bqkv_ref[...]   # (TQ, 3H) f32
    q_cd = qkv[:, 0:H].astype(compute_dtype)       # 1/sqrt(H) already folded in
    k_scr[pl.ds(q0, TQ), :] = qkv[:, H:2 * H].astype(k_scr.dtype)
    v_scr[pl.ds(q0, TQ), :] = qkv[:, 2 * H:3 * H].astype(v_scr.dtype)

    # ---- 2. causal QK^T: only key chunks c <= qi ----
    # NOTE: contraction on the shared last dim (flash-attention style); Mosaic
    # stages the transposed K operand into the MXU without an explicit vxpose.
    def sc_body(c, carry):
        c0 = pl.multiple_of(c * TQ, TQ)
        k_c = k_scr[pl.ds(c0, TQ), :]                                   # (TQ, H)
        s = jax.lax.dot_general(
            q_cd, k_c, dimension_numbers=(((1,), (1,)), ((), ())),
            preferred_element_type=jnp.float32)                        # (TQ, TQ)
        row = q0 + jax.lax.broadcasted_iota(jnp.int32, (TQ, TQ), 0)
        col = c0 + jax.lax.broadcasted_iota(jnp.int32, (TQ, TQ), 1)
        s = jnp.where(col <= row, s, neg)
        s_scr[:, pl.ds(c0, TQ)] = s
        return carry

    jax.lax.fori_loop(0, qi + 1, sc_body, 0)

    # Fill the fully-masked (future) key chunks with the mask value so the
    # full-width softmax and the emitted weights see exact zeros there.
    def mask_body(c, carry):
        c0 = pl.multiple_of(c * TQ, TQ)
        s_scr[:, pl.ds(c0, TQ)] = jnp.full((TQ, TQ), neg, jnp.float32)
        return carry

    jax.lax.fori_loop(qi + 1, n_tiles, mask_body, 0)

    # ---- 3. softmax over the full row (f32 elementwise / EUP) ----
    s = s_scr[...]
    s = s - jnp.max(s, axis=-1, keepdims=True)
    p = jnp.exp(s)
    denom = jnp.sum(p, axis=-1, keepdims=True)
    if emit_weights:
        p = p / denom                              # exact: rows sum to 1
        weights_ref[0] = p.astype(weights_ref.dtype)
    else:
        p = p * pl.reciprocal(denom, approx=True)
    s_scr[...] = p                                 # reuse slab as prob storage

    # ---- 4. P@V over valid key chunks only (bf16 MXU, f32 acc) ----
    def pv_body(c, acc):
        c0 = pl.multiple_of(c * TQ, TQ)
        p_c = s_scr[:, pl.ds(c0, TQ)].astype(compute_dtype)             # (TQ, TQ)
        v_c = v_scr[pl.ds(c0, TQ), :]                                   # (TQ, H)
        return acc + jnp.dot(p_c, v_c, preferred_element_type=jnp.float32)

    attn_out = jax.lax.fori_loop(
        0, qi + 1, pv_body, jnp.zeros((TQ, H), jnp.float32))

    # ---- 5. output projection (HF Conv1D: x @ W + b) ----
    proj = jnp.dot(attn_out.astype(compute_dtype), wproj_ref[...],
                   preferred_element_type=jnp.float32) + bproj_ref[...]
    out_ref[0] = proj.astype(out_ref.dtype)


def _vmem_capacity_bytes():
    try:
        return pltpu.get_tpu_info().vmem_capacity_bytes
    except Exception:
        return 64 << 20   # conservative default (v7x per-TC VMEM)


def _pick_q_tile(S):
    # v7x (<=64 MiB/TC): cap the query tile at 256; v5e/v6e (128 MiB): allow 512.
    max_tile = 512 if _vmem_capacity_bytes() > (96 << 20) else 256
    for cand in (512, 256, 128):
        if cand <= max_tile and S % cand == 0:
            return cand
    return S


def _vmem_limit_bytes(S, D, H, q_tile, emit_weights, cd_bytes):
    f32 = 4
    est = (
        2 * q_tile * D * f32                # x tile (double-buffered)
        + 2 * D * 3 * H * cd_bytes          # fused qkv weight
        + 2 * H * H * cd_bytes              # proj weight
        + 2 * 8 * 4 * H * f32               # biases (sublane-padded, conservative)
        + 2 * q_tile * H * f32              # output tiles
        + (2 * q_tile * S * f32 if emit_weights else 0)   # attn-weight tiles
        + 2 * S * H * cd_bytes              # k / v scratch
        + q_tile * S * f32                  # score / prob scratch
        + 4 * q_tile * S * f32              # live softmax intermediates
        + q_tile * 3 * H * f32              # qkv projection intermediate
    )
    cap = _vmem_capacity_bytes()
    return int(min(max(int(1.5 * est), 32 << 20), int(0.75 * cap)))


def _build_call(B, S, D, H, q_tile, emit_weights, compute_dtype):
    n_q = S // q_tile
    cd_bytes = jnp.dtype(compute_dtype).itemsize
    kernel = functools.partial(
        _attn_lora_kernel, seq=S, hidden=H, q_tile=q_tile,
        emit_weights=emit_weights, compute_dtype=compute_dtype)

    def const_spec(shape):
        # Constant-index weight/bias operands (same block every grid step).
        return pl.BlockSpec(shape, lambda b, t: (0, 0))

    out_shapes = [jax.ShapeDtypeStruct((B, S, H), jnp.float32)]
    out_specs = [pl.BlockSpec((1, q_tile, H), lambda b, t: (b, t, 0))]
    if emit_weights:
        out_shapes.append(jax.ShapeDtypeStruct((B, S, S), jnp.float32))
        out_specs.append(pl.BlockSpec((1, q_tile, S), lambda b, t: (b, t, 0)))

    return pl.pallas_call(
        kernel,
        out_shape=out_shapes,
        grid_spec=pltpu.PrefetchScalarGridSpec(
            num_scalar_prefetch=0,
            grid=(B, n_q),
            in_specs=[
                pl.BlockSpec((1, q_tile, D), lambda b, t: (b, t, 0)),  # x tile
                const_spec((D, 3 * H)),                                # W_qkv
                const_spec((1, 3 * H)),                                # b_qkv
                const_spec((H, H)),                                    # W_proj
                const_spec((1, H)),                                    # b_proj
            ],
            out_specs=out_specs,
            scratch_shapes=[
                pltpu.VMEM((S, H), compute_dtype),   # K (built incrementally)
                pltpu.VMEM((S, H), compute_dtype),   # V (built incrementally)
                pltpu.VMEM((q_tile, S), jnp.float32),  # scores / probs slab
            ],
        ),
        compiler_params=pltpu.CompilerParams(
            # batch axis parallel (megacore / v7x 2 TCs); the q-tile axis
            # carries the per-batch K/V scratch, so it stays "arbitrary".
            dimension_semantics=("parallel", "arbitrary"),
            vmem_limit_bytes=_vmem_limit_bytes(
                S, D, H, q_tile, emit_weights, cd_bytes),
        ),
    )


def gpt2_attention_with_lora(x, params, *, r=4, lora_alpha=32, q_tile=None,
                             return_weights=True,
                             compute_dtype=jnp.bfloat16):
    """x: [B, S, D] float32. Returns (attn_output [1,B,S,D], attn_weights [1,B,S,S])."""
    B, S, D = x.shape
    H = D
    scaling = float(lora_alpha) / float(r)
    inv_sqrt_h = 1.0 / float(H) ** 0.5

    # ---- wrapper-side weight prep (done once, outside the hot loop) ----
    # Fold LoRA into the frozen weights (W_eff = W^T + s * A @ B), fold the
    # 1/sqrt(H) attention scale into Wq/bq, and cast MXU operands to bf16.
    wq_eff = (params["wq"].T + scaling * (params["A_q"] @ params["B_q"])) * inv_sqrt_h
    bq_eff = params["bq"] * inv_sqrt_h
    wk_t = params["wk"].T
    wv_eff = params["wv"].T + scaling * (params["A_v"] @ params["B_v"])
    w_qkv = jnp.concatenate([wq_eff, wk_t, wv_eff], axis=1).astype(compute_dtype)
    b_qkv = jnp.concatenate(
        [bq_eff, jnp.zeros((H,), jnp.float32), params["bv"]]
    ).reshape(1, 3 * H).astype(jnp.float32)          # k_linear has no bias
    w_proj = params["wproj"].astype(compute_dtype)
    b_proj = params["bproj"].reshape(1, H).astype(jnp.float32)

    if q_tile is None:
        q_tile = _pick_q_tile(S)
    if S % q_tile != 0:
        q_tile = S

    call = _build_call(B, S, D, H, q_tile, return_weights, compute_dtype)
    outs = call(x, w_qkv, b_qkv, w_proj, b_proj)

    if return_weights:
        attn_out, attn_w = outs
        # HF broadcast artifact: [1,1,S,S] mask vs [B,S,S] scores -> 4-D outputs.
        return jnp.expand_dims(attn_out, 0), jnp.expand_dims(attn_w, 0)
    (attn_out,) = outs
    return jnp.expand_dims(attn_out, 0)


def _make_params(key, D, H, r):
    ks = jax.random.split(key, 10)
    return {
        # nn.Linear weights: [out_features, in_features]
        "wq": jax.random.normal(ks[0], (H, D), jnp.float32) * 0.02,
        "bq": jax.random.normal(ks[1], (H,), jnp.float32) * 0.02,
        "wk": jax.random.normal(ks[2], (H, D), jnp.float32) * 0.02,
        "wv": jax.random.normal(ks[3], (H, D), jnp.float32) * 0.02,
        "bv": jax.random.normal(ks[4], (H,), jnp.float32) * 0.02,
        # LoRA params: A [in, r], B [r, out], init * 0.01 (as in the module)
        "A_q": jax.random.normal(ks[5], (D, r), jnp.float32) * 0.01,
        "B_q": jax.random.normal(ks[6], (r, H), jnp.float32) * 0.01,
        "A_v": jax.random.normal(ks[7], (D, r), jnp.float32) * 0.01,
        "B_v": jax.random.normal(ks[8], (r, H), jnp.float32) * 0.01,
        # GPT2 Conv1D c_proj: weight [nx, nf] = [D, H], bias [H]
        "wproj": jax.random.normal(ks[9], (D, H), jnp.float32) * 0.02,
        "bproj": jnp.zeros((H,), jnp.float32),
    }


def _reference(x, params, r, lora_alpha):
    """Pure-JAX f32 reference mirroring the PyTorch module."""
    scaling = float(lora_alpha) / float(r)
    q = x @ params["wq"].T + params["bq"] + (x @ params["A_q"]) @ params["B_q"] * scaling
    k = x @ params["wk"].T
    v = x @ params["wv"].T + params["bv"] + (x @ params["A_v"]) @ params["B_v"] * scaling
    B, S, H = x.shape
    scores = jnp.einsum("bqd,bkd->bqk", q, k) / jnp.sqrt(jnp.float32(H))
    mask = jnp.tril(jnp.ones((S, S), bool))
    scores = jnp.where(mask[None], scores, jnp.finfo(jnp.float32).min)
    w = jax.nn.softmax(scores, axis=-1)
    attn = jnp.einsum("bqk,bkd->bqd", w, v)
    out = attn @ params["wproj"] + params["bproj"]
    return jnp.expand_dims(out, 0), jnp.expand_dims(w, 0)


if __name__ == "__main__":
    # Small but TPU-friendly demo shapes (lane-dense multiples of (8, 128)),
    # layout [batch, seq_len, embed_dim] as in the module.
    B, S, D = 2, 256, 128
    r, lora_alpha = 4, 32

    key = jax.random.PRNGKey(0)
    kx, kp = jax.random.split(key)
    x = jax.random.normal(kx, (B, S, D), jnp.float32)
    params = _make_params(kp, D, D, r)

    # q_tile=128 exercises the multi-tile causal-chunk path (grid = (B, 2)).
    attn_output, attn_weights = gpt2_attention_with_lora(
        x, params, r=r, lora_alpha=lora_alpha, q_tile=128)
    jax.block_until_ready((attn_output, attn_weights))

    assert attn_output.shape == (1, B, S, D)
    assert attn_weights.shape == (1, B, S, S)

    # Sanity checks: rows of the attention weights sum to 1 (exact division
    # path) and results track an f32 reference within bf16 MXU tolerance.
    row_sums = jnp.sum(attn_weights, axis=-1)
    assert float(jnp.max(jnp.abs(row_sums - 1.0))) < 1e-4
    ref_out, ref_w = _reference(x, params, r, lora_alpha)
    assert float(jnp.max(jnp.abs(attn_output - ref_out))) < 5e-2
    assert float(jnp.max(jnp.abs(attn_weights - ref_w))) < 5e-2

    print("KERNEL_OK")
</pallas_src>

<mosaic_0001>
module attributes {stable_mosaic.version = 11 : i64} {
  func.func @_attn_lora_kernel(%arg0: i32, %arg1: i32, %arg2: memref<1x128x128xf32, #tpu.memory_space<vmem>>, %arg3: memref<128x384xbf16, #tpu.memory_space<vmem>>, %arg4: memref<1x384xf32, #tpu.memory_space<vmem>>, %arg5: memref<128x128xbf16, #tpu.memory_space<vmem>>, %arg6: memref<1x128xf32, #tpu.memory_space<vmem>>, %arg7: memref<1x128x128xf32, #tpu.memory_space<vmem>>, %arg8: memref<1x128x256xf32, #tpu.memory_space<vmem>>, %arg9: memref<256x128xbf16, #tpu.memory_space<vmem>>, %arg10: memref<256x128xbf16, #tpu.memory_space<vmem>>, %arg11: memref<128x256xf32, #tpu.memory_space<vmem>>) attributes {dimension_semantics = [#tpu.dimension_semantics<parallel>, #tpu.dimension_semantics<arbitrary>], iteration_bounds = array<i64: 2, 2>, scalar_prefetch = 0 : i64, scratch_operands = 3 : i64, tpu.core_type = #tpu.core_type<tc>, window_params = [{transform_indices = @transform_0, window_bounds = array<i64: 1, 128, 128>}, {pipeline_mode = #tpu.pipeline_mode<synchronous>, transform_indices = @transform_1, window_bounds = array<i64: 128, 384>}, {pipeline_mode = #tpu.pipeline_mode<synchronous>, transform_indices = @transform_2, window_bounds = array<i64: 1, 384>}, {pipeline_mode = #tpu.pipeline_mode<synchronous>, transform_indices = @transform_3, window_bounds = array<i64: 128, 128>}, {pipeline_mode = #tpu.pipeline_mode<synchronous>, transform_indices = @transform_4, window_bounds = array<i64: 1, 128>}, {transform_indices = @transform_5, window_bounds = array<i64: 1, 128, 128>}, {transform_indices = @transform_6, window_bounds = array<i64: 1, 128, 256>}]} {
    %c128_i32 = arith.constant 128 : i32
    %0 = arith.muli %arg1, %c128_i32 : i32
    %1 = tpu.assume_multiple %0, 128 : i32
    %c0 = arith.constant 0 : index
    %c0_0 = arith.constant 0 : index
    %c0_1 = arith.constant 0 : index
    %2 = vector.load %arg2[%c0, %c0_0, %c0_1] : memref<1x128x128xf32, #tpu.memory_space<vmem>>, vector<1x128x128xf32>
    %3 = vector.shape_cast %2 : vector<1x128x128xf32> to vector<128x128xf32>
    %4 = arith.truncf %3 : vector<128x128xf32> to vector<128x128xbf16>
    %c0_2 = arith.constant 0 : index
    %c0_3 = arith.constant 0 : index
    %5 = vector.load %arg3[%c0_2, %c0_3] : memref<128x384xbf16, #tpu.memory_space<vmem>>, vector<128x384xbf16>
    %cst = arith.constant dense<0.000000e+00> : vector<128x384xf32>
    %6 = tpu.matmul %4, %5, %cst {dimension_numbers = #tpu.dot_dimension_numbers<[1], [0], [0], [1], [0, 0, 1, 1], [], []>} : vector<128x128xbf16>, vector<128x384xbf16>, vector<128x384xf32> -> vector<128x384xf32>
    %c0_4 = arith.constant 0 : index
    %c0_5 = arith.constant 0 : index
    %7 = vector.load %arg4[%c0_4, %c0_5] : memref<1x384xf32, #tpu.memory_space<vmem>>, vector<1x384xf32>
    %8 = vector.broadcast %7 : vector<1x384xf32> to vector<128x384xf32>
    %9 = arith.addf %6, %8 : vector<128x384xf32>
    %10 = vector.extract_strided_slice %9 {offsets = [0, 0], sizes = [128, 128], strides = [1, 1]} : vector<128x384xf32> to vector<128x128xf32>
    %11 = arith.truncf %10 : vector<128x128xf32> to vector<128x128xbf16>
    %12 = vector.extract_strided_slice %9 {offsets = [0, 128], sizes = [128, 128], strides = [1, 1]} : vector<128x384xf32> to vector<128x128xf32>
    %13 = arith.truncf %12 : vector<128x128xf32> to vector<128x128xbf16>
    %14 = arith.index_cast %1 : i32 to index
    %c0_6 = arith.constant 0 : index
    %15 = vector.load %arg9[%14, %c0_6] : memref<256x128xbf16, #tpu.memory_space<vmem>>, vector<128x128xbf16>
    tpu.vector_store %arg9[%14, %c0_6], %13 {strides = array<i32>} : memref<256x128xbf16, #tpu.memory_space<vmem>>, vector<128x128xbf16>,
    %16 = vector.extract_strided_slice %9 {offsets = [0, 256], sizes = [128, 128], strides = [1, 1]} : vector<128x384xf32> to vector<128x128xf32>
    %17 = arith.truncf %16 : vector<128x128xf32> to vector<128x128xbf16>
    %18 = arith.index_cast %1 : i32 to index
    %c0_7 = arith.constant 0 : index
    %19 = vector.load %arg10[%18, %c0_7] : memref<256x128xbf16, #tpu.memory_space<vmem>>, vector<128x128xbf16>
    tpu.vector_store %arg10[%18, %c0_7], %17 {strides = array<i32>} : memref<256x128xbf16, #tpu.memory_space<vmem>>, vector<128x128xbf16>,
    %c1_i32 = arith.constant 1 : i32
    %20 = arith.addi %arg1, %c1_i32 : i32
    %c0_i32 = arith.constant 0 : i32
    %c0_i32_8 = arith.constant 0 : i32
    %21 = arith.subi %20, %c0_i32_8 : i32
    %22 = arith.addi %c0_i32_8, %21 : i32
    %c1_i32_9 = arith.constant 1 : i32
    scf.for %arg12 = %c0_i32_8 to %22 step %c1_i32_9  : i32 {
      %c128_i32_34 = arith.constant 128 : i32
      %54 = arith.muli %arg12, %c128_i32_34 : i32
      %55 = tpu.assume_multiple %54, 128 : i32
      %56 = arith.index_cast %55 : i32 to index
      %c0_35 = arith.constant 0 : index
      %57 = vector.load %arg9[%56, %c0_35] : memref<256x128xbf16, #tpu.memory_space<vmem>>, vector<128x128xbf16>
      %cst_36 = arith.constant dense<0.000000e+00> : vector<128x128xf32>
      %58 = tpu.matmul %11, %57, %cst_36 {dimension_numbers = #tpu.dot_dimension_numbers<[1], [1], [0], [0], [0, 0, 1, 0], [], []>} : vector<128x128xbf16>, vector<128x128xbf16>, vector<128x128xf32> -> vector<128x128xf32>
      %59 = tpu.iota {dimensions = array<i32: 0>} : vector<128x128xi32>
      %60 = vector.broadcast %1 : i32 to vector<128x128xi32>
      %61 = arith.addi %60, %59 : vector<128x128xi32>
      %62 = tpu.iota {dimensions = array<i32: 1>} : vector<128x128xi32>
      %63 = vector.broadcast %55 : i32 to vector<128x128xi32>
      %64 = arith.addi %63, %62 : vector<128x128xi32>
      %65 = arith.cmpi sle, %64, %61 : vector<128x128xi32>
      %cst_37 = arith.constant -3.40282347E+38 : f32
      %66 = vector.broadcast %cst_37 : f32 to vector<128x128xf32>
      %67 = arith.select %65, %58, %66 : vector<128x128xi1>, vector<128x128xf32>
      %c0_38 = arith.constant 0 : index
      %68 = arith.index_cast %55 : i32 to index
      %69 = vector.load %arg11[%c0_38, %68] : memref<128x256xf32, #tpu.memory_space<vmem>>, vector<128x128xf32>
      tpu.vector_store %arg11[%c0_38, %68], %67 {strides = array<i32>} : memref<128x256xf32, #tpu.memory_space<vmem>>, vector<128x128xf32>,
    }
    %c1_i32_10 = arith.constant 1 : i32
    %23 = arith.addi %arg1, %c1_i32_10 : i32
    %c0_i32_11 = arith.constant 0 : i32
    %c2_i32 = arith.constant 2 : i32
    %24 = arith.subi %c2_i32, %23 : i32
    %25 = arith.addi %23, %24 : i32
    %c1_i32_12 = arith.constant 1 : i32
    scf.for %arg12 = %23 to %25 step %c1_i32_12  : i32 {
      %c128_i32_34 = arith.constant 128 : i32
      %54 = arith.muli %arg12, %c128_i32_34 : i32
      %55 = tpu.assume_multiple %54, 128 : i32
      %cst_35 = arith.constant -3.40282347E+38 : f32
      %56 = vector.broadcast %cst_35 : f32 to vector<128x128xf32>
      %c0_36 = arith.constant 0 : index
      %57 = arith.index_cast %55 : i32 to index
      %58 = vector.load %arg11[%c0_36, %57] : memref<128x256xf32, #tpu.memory_space<vmem>>, vector<128x128xf32>
      tpu.vector_store %arg11[%c0_36, %57], %56 {strides = array<i32>} : memref<128x256xf32, #tpu.memory_space<vmem>>, vector<128x128xf32>,
    }
    %c0_13 = arith.constant 0 : index
    %c0_14 = arith.constant 0 : index
    %26 = vector.load %arg11[%c0_13, %c0_14] : memref<128x256xf32, #tpu.memory_space<vmem>>, vector<128x256xf32>
    %cst_15 = arith.constant dense<0xFF800000> : vector<128xf32>
    %27 = vector.multi_reduction <maximumf>, %26, %cst_15 [1] : vector<128x256xf32> to vector<128xf32>
    %28 = vector.shape_cast %27 : vector<128xf32> to vector<128x1xf32>
    %29 = vector.broadcast %28 : vector<128x1xf32> to vector<128x256xf32>
    %30 = arith.subf %26, %29 : vector<128x256xf32>
    %31 = math.exp %30 : vector<128x256xf32>
    %cst_16 = arith.constant dense<0.000000e+00> : vector<128xf32>
    %32 = vector.multi_reduction <add>, %31, %cst_16 [1] : vector<128x256xf32> to vector<128xf32>
    %33 = vector.shape_cast %32 : vector<128xf32> to vector<128x1xf32>
    %34 = vector.broadcast %33 : vector<128x1xf32> to vector<128x256xf32>
    %35 = arith.divf %31, %34 : vector<128x256xf32>
    %c0_17 = arith.constant 0 : index
    %c0_18 = arith.constant 0 : index
    %c0_19 = arith.constant 0 : index
    %36 = vector.load %arg8[%c0_17, %c0_18, %c0_19] : memref<1x128x256xf32, #tpu.memory_space<vmem>>, vector<1x128x256xf32>
    %37 = vector.shape_cast %36 : vector<1x128x256xf32> to vector<128x256xf32>
    %38 = vector.shape_cast %35 : vector<128x256xf32> to vector<1x128x256xf32>
    tpu.vector_store %arg8[%c0_17, %c0_18, %c0_19], %38 {strides = array<i32>} : memref<1x128x256xf32, #tpu.memory_space<vmem>>, vector<1x128x256xf32>,
    %c0_20 = arith.constant 0 : index
    %c0_21 = arith.constant 0 : index
    %39 = vector.load %arg11[%c0_20, %c0_21] : memref<128x256xf32, #tpu.memory_space<vmem>>, vector<128x256xf32>
    tpu.vector_store %arg11[%c0_20, %c0_21], %35 {strides = array<i32>} : memref<128x256xf32, #tpu.memory_space<vmem>>, vector<128x256xf32>,
    %c1_i32_22 = arith.constant 1 : i32
    %40 = arith.addi %arg1, %c1_i32_22 : i32
    %cst_23 = arith.constant 0.000000e+00 : f32
    %41 = vector.broadcast %cst_23 : f32 to vector<128x128xf32>
    %c0_i32_24 = arith.constant 0 : i32
    %42 = arith.subi %40, %c0_i32_24 : i32
    %43 = arith.addi %c0_i32_24, %42 : i32
    %c1_i32_25 = arith.constant 1 : i32
    %44 = scf.for %arg12 = %c0_i32_24 to %43 step %c1_i32_25 iter_args(%arg13 = %41) -> (vector<128x128xf32>)  : i32 {
      %c128_i32_34 = arith.constant 128 : i32
      %54 = arith.muli %arg12, %c128_i32_34 : i32
      %55 = tpu.assume_multiple %54, 128 : i32
      %c0_35 = arith.constant 0 : index
      %56 = arith.index_cast %55 : i32 to index
      %57 = vector.load %arg11[%c0_35, %56] : memref<128x256xf32, #tpu.memory_space<vmem>>, vector<128x128xf32>
      %58 = arith.truncf %57 : vector<128x128xf32> to vector<128x128xbf16>
      %59 = arith.index_cast %55 : i32 to index
      %c0_36 = arith.constant 0 : index
      %60 = vector.load %arg10[%59, %c0_36] : memref<256x128xbf16, #tpu.memory_space<vmem>>, vector<128x128xbf16>
      %cst_37 = arith.constant dense<0.000000e+00> : vector<128x128xf32>
      %61 = tpu.matmul %58, %60, %cst_37 {dimension_numbers = #tpu.dot_dimension_numbers<[1], [0], [0], [1], [0, 0, 1, 1], [], []>} : vector<128x128xbf16>, vector<128x128xbf16>, vector<128x128xf32> -> vector<128x128xf32>
      %62 = arith.addf %arg13, %61 : vector<128x128xf32>
      scf.yield %62 : vector<128x128xf32>
    }
    %45 = arith.truncf %44 : vector<128x128xf32> to vector<128x128xbf16>
    %c0_26 = arith.constant 0 : index
    %c0_27 = arith.constant 0 : index
    %46 = vector.load %arg5[%c0_26, %c0_27] : memref<128x128xbf16, #tpu.memory_space<vmem>>, vector<128x128xbf16>
    %cst_28 = arith.constant dense<0.000000e+00> : vector<128x128xf32>
    %47 = tpu.matmul %45, %46, %cst_28 {dimension_numbers = #tpu.dot_dimension_numbers<[1], [0], [0], [1], [0, 0, 1, 1], [], []>} : vector<128x128xbf16>, vector<128x128xbf16>, vector<128x128xf32> -> vector<128x128xf32>
    %c0_29 = arith.constant 0 : index
    %c0_30 = arith.constant 0 : index
    %48 = vector.load %arg6[%c0_29, %c0_30] : memref<1x128xf32, #tpu.memory_space<vmem>>, vector<1x128xf32>
    %49 = vector.broadcast %48 : vector<1x128xf32> to vector<128x128xf32>
    %50 = arith.addf %47, %49 : vector<128x128xf32>
    %c0_31 = arith.constant 0 : index
    %c0_32 = arith.constant 0 : index
    %c0_33 = arith.constant 0 : index
    %51 = vector.load %arg7[%c0_31, %c0_32, %c0_33] : memref<1x128x128xf32, #tpu.memory_space<vmem>>, vector<1x128x128xf32>
    %52 = vector.shape_cast %51 : vector<1x128x128xf32> to vector<128x128xf32>
    %53 = vector.shape_cast %50 : vector<128x128xf32> to vector<1x128x128xf32>
    tpu.vector_store %arg7[%c0_31, %c0_32, %c0_33], %53 {strides = array<i32>} : memref<1x128x128xf32, #tpu.memory_space<vmem>>, vector<1x128x128xf32>,
    return
  }
  func.func @transform_0(%arg0: i32, %arg1: i32) -> (i32, i32, i32) {
    %c0_i32 = arith.constant 0 : i32
    %c0_i32_0 = arith.constant 0 : i32
    return %arg0, %arg1, %c0_i32 : i32, i32, i32
  }
  func.func @transform_1(%arg0: i32, %arg1: i32) -> (i32, i32) {
    %c0_i32 = arith.constant 0 : i32
    %c0_i32_0 = arith.constant 0 : i32
    %c0_i32_1 = arith.constant 0 : i32
    return %c0_i32, %c0_i32_0 : i32, i32
  }
  func.func @transform_2(%arg0: i32, %arg1: i32) -> (i32, i32) {
    %c0_i32 = arith.constant 0 : i32
    %c0_i32_0 = arith.constant 0 : i32
    %c0_i32_1 = arith.constant 0 : i32
    return %c0_i32, %c0_i32_0 : i32, i32
  }
  func.func @transform_3(%arg0: i32, %arg1: i32) -> (i32, i32) {
    %c0_i32 = arith.constant 0 : i32
    %c0_i32_0 = arith.constant 0 : i32
    %c0_i32_1 = arith.constant 0 : i32
    return %c0_i32, %c0_i32_0 : i32, i32
  }
  func.func @transform_4(%arg0: i32, %arg1: i32) -> (i32, i32) {
    %c0_i32 = arith.constant 0 : i32
    %c0_i32_0 = arith.constant 0 : i32
    %c0_i32_1 = arith.constant 0 : i32
    return %c0_i32, %c0_i32_0 : i32, i32
  }
  func.func @transform_5(%arg0: i32, %arg1: i32) -> (i32, i32, i32) {
    %c0_i32 = arith.constant 0 : i32
    %c0_i32_0 = arith.constant 0 : i32
    return %arg0, %arg1, %c0_i32 : i32, i32, i32
  }
  func.func @transform_6(%arg0: i32, %arg1: i32) -> (i32, i32, i32) {
    %c0_i32 = arith.constant 0 : i32
    %c0_i32_0 = arith.constant 0 : i32
    return %arg0, %arg1, %c0_i32 : i32, i32, i32
  }
}

</mosaic_0001>

<llo_original>
// kernel: tpu_custom_call.1
$region0: #{tpu_custom_call.1}
  #allocation0 [shape = 'u32[]', space=smem, size = 0x4, offset = 0x4, fixed_abs, tag = 'smem constant byte address 0x4 - core index']
  #allocation1 [shape = 'u32[144,128]{1,0:T(1,128)}', space=vmem, size = 0x12000, scoped, tag = 'internal scratch']
  #allocation2 [shape = 'bf16[256,128]{1,0:T(16,128)(2,1)}', space=vmem, size = 0x10000, scoped, tag = 'scratch operand']
  #allocation3 [shape = 'bf16[256,128]{1,0:T(16,128)(2,1)}', space=vmem, size = 0x10000, scoped, tag = 'scratch operand']
  #allocation4 [shape = 'f32[128,256]{1,0:T(8,128)}', space=vmem, size = 0x20000, scoped, tag = 'scratch operand']
  %s0 = inlined_call_operand.hbm [shape: f32[2,256,128], index: 0, kind: input, shape index: {}]
  %s1 = inlined_call_operand.hbm [shape: bf16[128,384], index: 1, kind: input, shape index: {}]
  %s2 = inlined_call_operand.vmem [shape: f32[1,384], index: 2, kind: input, shape index: {}]
  %s3 = inlined_call_operand.hbm [shape: bf16[128,128], index: 3, kind: input, shape index: {}]
  %s4 = inlined_call_operand.vmem [shape: f32[1,128], index: 4, kind: input, shape index: {}]
  %s5 = inlined_call_operand.hbm [shape: f32[2,256,128], index: 5, kind: output, shape index: {0}]
  %s6 = inlined_call_operand.hbm [shape: f32[2,256,256], index: 6, kind: output, shape index: {1}]
  %7 = xla_tuple %s5, %s6
  %s8 = sld [smem:[#allocation0]]
  $region94: #{tpu_custom_call.1} parent=0
    _
  %s10 = ssub.s32 1, %s8
  %s11 = scalar_select 0, %s10, %s8
  $region1: #{tpu_custom_call.1} parent=0
    #allocation5 [shape = 'u8[131072]{0}', space=vmem, size = 0x20000, scoped, tag = 'input window, operand 0']
    #allocation6 [shape = 's32[2]{0}', space=sflag, size = 0x8, scoped, tag = 'scoped memory for tpu_custom_call.1']
    #allocation7 [shape = 's32[2]{0}', space=sflag, size = 0x8, scoped, tag = 'scoped memory for tpu_custom_call.1']
    #allocation8 [shape = 'u8[98304]{0}', space=vmem, size = 0x18000, scoped, tag = 'input window, operand 1, single buffered']
    #allocation9 [shape = 's32[1]{0}', space=sflag, size = 0x4, scoped, tag = 'scoped memory for tpu_custom_call.1']
    #allocation10 [shape = 'u8[32768]{0}', space=vmem, size = 0x8000, scoped, tag = 'input window, operand 3, single buffered']
    #allocation11 [shape = 'u8[131072]{0}', space=vmem, size = 0x20000, scoped, tag = 'output window, operand 0']
    #allocation12 [shape = 'u8[262144]{0}', space=vmem, size = 0x40000, scoped, tag = 'output window, operand 1']
    #allocation13 [shape = 's32[2]{0}', space=sflag, size = 0x8, scoped, tag = 'scoped memory for tpu_custom_call.1']
    %12 = vsyncpa [#allocation6], 0
    %s13 = scalar_lea.sflag [#allocation6], 1
    %14 = vsyncpa %s13, 0
    %15 = vsyncpa [#allocation9], 0
    %16 = vsyncpa [#allocation7], 0
    %s17 = scalar_lea.sflag [#allocation7], 1
    %18 = vsyncpa %s17, 0
    %19 = vsyncpa [#allocation13], 0
    %s20 = scalar_lea.sflag [#allocation13], 1
    %21 = vsyncpa %s20, 0
    loop: start=0, step=1, limit=6
    $region2: #{tpu_custom_call.1} parent=1 // loop_pre_header
      _
    $region3: #{tpu_custom_call.1} parent=1 // loop_header
      %s23 = sphi 0, %s27
      %p24 = scmp.ge.s32.totalorder %s23, 6
      %s30 = sphi 0, %s42
      %s31 = sphi 0, %s38
      %s32 = sphi 0, %s30
      %s33 = sphi 0, %s31
      %s34 = sphi 0, %s32
      %s35 = sphi 0, %s33
      %s47 = sphi 0, %s49
      %s50 = sphi 0, %s47
      %s51 = sphi 0, %s50
      %s67 = sphi 0, %s51
      %s71 = sphi 0, %s71
      %s73 = sphi 0, %s71
      %s74 = sphi 0, %s73
      %s88 = sphi 0, %s74
      %s92 = sphi 0, %s92
      %s94 = sphi 0, %s92
      %s95 = sphi 0, %s94
      %s109 = sphi 0, %s95
      %s113 = sphi 0, %s113
      %s115 = sphi 0, %s113
      %s116 = sphi 0, %s115
      %s130 = sphi 0, %s116
      %s134 = sphi 0, %s134
      %s136 = sphi 0, %s134
      %s137 = sphi 0, %s136
      %s151 = sphi 0, %s137
      %s159 = sphi 0, %s161
      %s162 = sphi 0, %s159
      %s163 = sphi 0, %s162
      %s179 = sphi 0, %s163
      %s187 = sphi 0, %s189
      %s190 = sphi 0, %s187
      %s191 = sphi 0, %s190
      %s207 = sphi 0, %s191
    $region4: #{tpu_custom_call.1} parent=1 // loop_header_branch
      %26 = sbr.rel (%p24) target = $region8
    $region5: #{tpu_custom_call.1} parent=1 // loop_body
      %s28 = ssub.s32 %s23, 1
      %s29 = ssub.s32 %s23, 2
      %s36 = sadd.s32 1, %s31
      %p37 = scmp.ge.s32.totalorder %s36, 2
      %s38 = scalar_select %p37, 0, %s36
      %s39 = sadd.s32 1, %s30
      %s40 = scalar_select %p37, %s39, %s30
      %p41 = scmp.ge.s32.totalorder %s40, 2
      %s42 = scalar_select %p41, 0, %s40
      %s43 = ssub.s32 %s30, %s42
      %s44 = ssub.s32 %s31, %s38
      %s45 = sor.u32 %s43, %s44
      %p46 = scmp.eq.s32.totalorder %s45, 0
      %s48 = sadd.s32 %s47, 1
      %s49 = scalar_select %p46, %s47, %s48
      %p52 = pneg %p46
      %p53 = scmp.eq.s32.totalorder %s23, 3
      %p54 = por %p52, %p53
      %p55 = scmp.ne.s32.totalorder %s47, %s50
      %p56 = scmp.eq.s32.totalorder %s23, 0
      %p57 = por %p55, %p56
      %p58 = scmp.ne.s32.totalorder %s47, %s50
      %p59 = scmp.eq.s32.totalorder %s28, 3
      %p60 = por %p58, %p59
      %p61 = scmp.ne.s32.totalorder %s50, %s51
      %p62 = scmp.eq.s32.totalorder %s28, 0
      %p63 = por %p61, %p62
      %p64 = scmp.ne.s32.totalorder %s50, %s51
      %p65 = scmp.eq.s32.totalorder %s29, 3
      %p66 = por %p64, %p65
      %p68 = scmp.ne.s32.totalorder %s51, %s67
      %p69 = scmp.eq.s32.totalorder %s29, 0
      %p70 = por %p68, %p69
      %s72 = sadd.s32 %s71, 1
      %p75 = scmp.eq.s32.totalorder %s23, 3
      %p76 = scmp.ne.s32.totalorder %s71, %s73
      %p77 = scmp.eq.s32.totalorder %s23, 0
      %p78 = por %p76, %p77
      %p79 = scmp.ne.s32.totalorder %s71, %s73
      %p80 = scmp.eq.s32.totalorder %s28, 3
      %p81 = por %p79, %p80
      %p82 = scmp.ne.s32.totalorder %s73, %s74
      %p83 = scmp.eq.s32.totalorder %s28, 0
      %p84 = por %p82, %p83
      %p85 = scmp.ne.s32.totalorder %s73, %s74
      %p86 = scmp.eq.s32.totalorder %s29, 3
      %p87 = por %p85, %p86
      %p89 = scmp.ne.s32.totalorder %s74, %s88
      %p90 = scmp.eq.s32.totalorder %s29, 0
      %p91 = por %p89, %p90
      %s93 = sadd.s32 %s92, 1
      %p96 = scmp.eq.s32.totalorder %s23, 3
      %p97 = scmp.ne.s32.totalorder %s92, %s94
      %p98 = scmp.eq.s32.totalorder %s23, 0
      %p99 = por %p97, %p98
      %p100 = scmp.ne.s32.totalorder %s92, %s94
      %p101 = scmp.eq.s32.totalorder %s28, 3
      %p102 = por %p100, %p101
      %p103 = scmp.ne.s32.totalorder %s94, %s95
      %p104 = scmp.eq.s32.totalorder %s28, 0
      %p105 = por %p103, %p104
      %p106 = scmp.ne.s32.totalorder %s94, %s95
      %p107 = scmp.eq.s32.totalorder %s29, 3
      %p108 = por %p106, %p107
      %p110 = scmp.ne.s32.totalorder %s95, %s109
      %p111 = scmp.eq.s32.totalorder %s29, 0
      %p112 = por %p110, %p111
      %s114 = sadd.s32 %s113, 1
      %p117 = scmp.eq.s32.totalorder %s23, 3
      %p118 = scmp.ne.s32.totalorder %s113, %s115
      %p119 = scmp.eq.s32.totalorder %s23, 0
      %p120 = por %p118, %p119
      %p121 = scmp.ne.s32.totalorder %s113, %s115
      %p122 = scmp.eq.s32.totalorder %s28, 3
      %p123 = por %p121, %p122
      %p124 = scmp.ne.s32.totalorder %s115, %s116
      %p125 = scmp.eq.s32.totalorder %s28, 0
      %p126 = por %p124, %p125
      %p127 = scmp.ne.s32.totalorder %s115, %s116
      %p128 = scmp.eq.s32.totalorder %s29, 3
      %p129 = por %p127, %p128
      %p131 = scmp.ne.s32.totalorder %s116, %s130
      %p132 = scmp.eq.s32.totalorder %s29, 0
      %p133 = por %p131, %p132
      %s135 = sadd.s32 %s134, 1
      %p138 = scmp.eq.s32.totalorder %s23, 3
      %p139 = scmp.ne.s32.totalorder %s134, %s136
      %p140 = scmp.eq.s32.totalorder %s23, 0
      %p141 = por %p139, %p140
      %p142 = scmp.ne.s32.totalorder %s134, %s136
      %p143 = scmp.eq.s32.totalorder %s28, 3
      %p144 = por %p142, %p143
      %p145 = scmp.ne.s32.totalorder %s136, %s137
      %p146 = scmp.eq.s32.totalorder %s28, 0
      %p147 = por %p145, %p146
      %p148 = scmp.ne.s32.totalorder %s136, %s137
      %p149 = scmp.eq.s32.totalorder %s29, 3
      %p150 = por %p148, %p149
      %p152 = scmp.ne.s32.totalorder %s137, %s151
      %p153 = scmp.eq.s32.totalorder %s29, 0
      %p154 = por %p152, %p153
      %s155 = ssub.s32 %s30, %s42
      %s156 = ssub.s32 %s31, %s38
      %s157 = sor.u32 %s155, %s156
      %p158 = scmp.eq.s32.totalorder %s157, 0
      %s160 = sadd.s32 %s159, 1
      %s161 = scalar_select %p158, %s159, %s160
      %p164 = pneg %p158
      %p165 = scmp.eq.s32.totalorder %s23, 3
      %p166 = por %p164, %p165
      %p167 = scmp.ne.s32.totalorder %s159, %s162
      %p168 = scmp.eq.s32.totalorder %s23, 0
      %p169 = por %p167, %p168
      %p170 = scmp.ne.s32.totalorder %s159, %s162
      %p171 = scmp.eq.s32.totalorder %s28, 3
      %p172 = por %p170, %p171
      %p173 = scmp.ne.s32.totalorder %s162, %s163
      %p174 = scmp.eq.s32.totalorder %s28, 0
      %p175 = por %p173, %p174
      %p176 = scmp.ne.s32.totalorder %s162, %s163
      %p177 = scmp.eq.s32.totalorder %s29, 3
      %p178 = por %p176, %p177
      %p180 = scmp.ne.s32.totalorder %s163, %s179
      %p181 = scmp.eq.s32.totalorder %s29, 0
      %p182 = por %p180, %p181
      %s183 = ssub.s32 %s30, %s42
      %s184 = ssub.s32 %s31, %s38
      %s185 = sor.u32 %s183, %s184
      %p186 = scmp.eq.s32.totalorder %s185, 0
      %s188 = sadd.s32 %s187, 1
      %s189 = scalar_select %p186, %s187, %s188
      %p192 = pneg %p186
      %p193 = scmp.eq.s32.totalorder %s23, 3
      %p194 = por %p192, %p193
      %p195 = scmp.ne.s32.totalorder %s187, %s190
      %p196 = scmp.eq.s32.totalorder %s23, 0
      %p197 = por %p195, %p196
      %p198 = scmp.ne.s32.totalorder %s187, %s190
      %p199 = scmp.eq.s32.totalorder %s28, 3
      %p200 = por %p198, %p199
      %p201 = scmp.ne.s32.totalorder %s190, %s191
      %p202 = scmp.eq.s32.totalorder %s28, 0
      %p203 = por %p201, %p202
      %p204 = scmp.ne.s32.totalorder %s190, %s191
      %p205 = scmp.eq.s32.totalorder %s29, 3
      %p206 = por %p204, %p205
      %p208 = scmp.ne.s32.totalorder %s191, %s207
      %p209 = scmp.eq.s32.totalorder %s29, 0
      %p210 = por %p208, %p209
      %p211 = scmp.le.s32.totalorder 1, %s23
      %p212 = scmp.lt.s32.totalorder %s23, 5
      %p213 = pnand %p211, %p212
      %p214 = pneg %p213
      // Predicated region
      $region9: #{tpu_custom_call.1} parent=5 // pred_check
        _
      $region10: #{tpu_custom_call.1} parent=5 // pred_check_branch
        %216 = sbr.rel (%p213) target = $region12
      $region11: #{tpu_custom_call.1} parent=5 // pred_region
        %s217 = ssub.s32 %s23, 1
        // Predicated region
        $region13: #{tpu_custom_call.1} parent=11 // pred_check
          %p218 = pneg %p84
        $region14: #{tpu_custom_call.1} parent=11 // pred_check_branch
          %220 = sbr.rel (%p218) target = $region16
        $region15: #{tpu_custom_call.1} parent=11 // pred_region
          %s222 = ssub.s32 3072, 3072
          %223 = vsyncadd [#allocation9], %s222
          %s224 = sshll.u32 [#allocation8], 4
          %s225 = int_to_ptr.vmem [resolvable:$true] %s224
          %230 = dma.hbm_to_vmem [thread:$0]  %s1, 3072, %s225, [#allocation9], 192, 192, 12
        $region16: #{tpu_custom_call.1} parent=11 // pred_fallthru
          _
        // Predicated region
        $region17: #{tpu_custom_call.1} parent=11 // pred_check
          %p231 = pneg %p105
        $region18: #{tpu_custom_call.1} parent=11 // pred_check_branch
          %233 = sbr.rel (%p231) target = $region20
        $region19: #{tpu_custom_call.1} parent=11 // pred_region
          _
        $region20: #{tpu_custom_call.1} parent=11 // pred_fallthru
          _
        // Predicated region
        $region21: #{tpu_custom_call.1} parent=11 // pred_check
          %p234 = pneg %p126
        $region22: #{tpu_custom_call.1} parent=11 // pred_check_branch
          %236 = sbr.rel (%p234) target = $region24
        $region23: #{tpu_custom_call.1} parent=11 // pred_region
          %s238 = ssub.s32 1024, 1024
          %239 = vsyncadd [#allocation9], %s238
          %s240 = sshll.u32 [#allocation10], 4
          %s241 = int_to_ptr.vmem [resolvable:$true] %s240
          %246 = dma.hbm_to_vmem [thread:$0]  %s3, 1024, %s241, [#allocation9], 64, 64, 4
        $region24: #{tpu_custom_call.1} parent=11 // pred_fallthru
          _
        // Predicated region
        $region25: #{tpu_custom_call.1} parent=11 // pred_check
          %p247 = pneg %p147
        $region26: #{tpu_custom_call.1} parent=11 // pred_check_branch
          %249 = sbr.rel (%p247) target = $region28
        $region27: #{tpu_custom_call.1} parent=11 // pred_region
          _
        $region28: #{tpu_custom_call.1} parent=11 // pred_fallthru
          _
      $region12: #{tpu_custom_call.1} parent=5 // pred_fallthru
        _
      %p250 = scmp.lt.s32.totalorder %s23, 4
      // Predicated region
      $region29: #{tpu_custom_call.1} parent=5 // pred_check
        %p251 = pneg %p250
      $region30: #{tpu_custom_call.1} parent=5 // pred_check_branch
        %253 = sbr.rel (%p251) target = $region32
      $region31: #{tpu_custom_call.1} parent=5 // pred_region
        // Predicated region
        $region33: #{tpu_custom_call.1} parent=31 // pred_check
          %p254 = pneg %p57
        $region34: #{tpu_custom_call.1} parent=31 // pred_check_branch
          %256 = sbr.rel (%p254) target = $region36
        $region35: #{tpu_custom_call.1} parent=31 // pred_region
          %s257 = sand.u32 %s47, 1
          %s258 = scalar_lea.sflag [#allocation6], %s257
          %s259 = sand.u32 %s47, 1
          %s260 = smul.addr %s259, 128
          %s261 = scalar_lea.vmem [#allocation5], %s260
          %s262 = smul.u32 16, %s31
          %s264 = ssub.s32 2048, 2048
          %265 = vsyncadd %s258, %s264
          %s266 = smul.addr %s30, 32
          %s267 = sadd.s32 %s262, %s266
          %s268 = smul.addr %s267, 128
          %s269 = scalar_lea.hbm %s0, %s268
          %s270 = sshll.u32 %s261, 4
          %s271 = int_to_ptr.vmem [resolvable:$true] %s270
          %276 = dma.hbm_to_vmem [thread:$0]  %s269, 2048, %s271, %s258, 128, 128, 8
        $region36: #{tpu_custom_call.1} parent=31 // pred_fallthru
          _
      $region32: #{tpu_custom_call.1} parent=5 // pred_fallthru
        _
      %p277 = scmp.le.s32.totalorder 1, %s23
      %p278 = scmp.lt.s32.totalorder %s23, 5
      %p279 = pnand %p277, %p278
      %p280 = pneg %p279
      // Predicated region
      $region37: #{tpu_custom_call.1} parent=5 // pred_check
        _
      $region38: #{tpu_custom_call.1} parent=5 // pred_check_branch
        %282 = sbr.rel (%p279) target = $region40
      $region39: #{tpu_custom_call.1} parent=5 // pred_region
        %s283 = ssub.s32 %s23, 1
        %s284 = sand.u32 %s50, 1
        %s285 = scalar_lea.sflag [#allocation6], %s284
        %s286 = sand.u32 %s50, 1
        %s287 = smul.addr %s286, 128
        %s288 = scalar_lea.vmem [#allocation5], %s287
        // Predicated region
        $region41: #{tpu_custom_call.1} parent=39 // pred_check
          %p289 = pneg %p63
        $region42: #{tpu_custom_call.1} parent=39 // pred_check_branch
          %291 = sbr.rel (%p289) target = $region44
        $region43: #{tpu_custom_call.1} parent=39 // pred_region
          %292 = dma.done %s285, 2048
        $region44: #{tpu_custom_call.1} parent=39 // pred_fallthru
          _
        // Predicated region
        $region45: #{tpu_custom_call.1} parent=39 // pred_check
          %p293 = pneg %p84
        $region46: #{tpu_custom_call.1} parent=39 // pred_check_branch
          %295 = sbr.rel (%p293) target = $region48
        $region47: #{tpu_custom_call.1} parent=39 // pred_region
          %296 = dma.done [#allocation9], 3072
        $region48: #{tpu_custom_call.1} parent=39 // pred_fallthru
          _
        // Predicated region
        $region49: #{tpu_custom_call.1} parent=39 // pred_check
          %p297 = pneg %p126
        $region50: #{tpu_custom_call.1} parent=39 // pred_check_branch
          %299 = sbr.rel (%p297) target = $region52
        $region51: #{tpu_custom_call.1} parent=39 // pred_region
          %300 = dma.done [#allocation9], 1024
        $region52: #{tpu_custom_call.1} parent=39 // pred_fallthru
          _
        %s301 = sand.u32 %s50, 1
        %s302 = scalar_lea.sflag [#allocation6], %s301
        %s303 = sand.u32 %s50, 1
        %s304 = smul.addr %s303, 128
        %s305 = scalar_lea.vmem [#allocation5], %s304
        %p306 = pneg %p63
        %p307 = pneg %p60
        %p308 = pneg %p84
        %p309 = pneg %p81
        %p310 = pneg %p105
        %p311 = pneg %p102
        %p312 = pneg %p126
        %p313 = pneg %p123
        %p314 = pneg %p147
        %p315 = pneg %p144
        %p316 = pneg %p175
        %p317 = pneg %p172
        %s318 = sand.u32 %s162, 1
        %s319 = scalar_lea.sflag [#allocation7], %s318
        %s320 = sand.u32 %s162, 1
        %s321 = smul.addr %s320, 128
        %s322 = scalar_lea.vmem [#allocation11], %s321
        %p323 = pneg %p203
        %p324 = pneg %p200
        %s325 = sand.u32 %s190, 1
        %s326 = scalar_lea.sflag [#allocation13], %s325
        %s327 = sand.u32 %s190, 1
        %s328 = smul.addr %s327, 256
        %s329 = scalar_lea.vmem [#allocation12], %s328
        %s330 = smul.u32 16, %s33
        %s331 = smul.u32 16, %s33
        %s332 = smul.u32 16, %s33
        %s334 = smul.u32 %s33, 128
        %v335 = vld [vmem:[%s288] sm:$0xff]
        %v336 = vld [vmem:[%s288 + $0x8] sm:$0xff]
        %v337 = vld [vmem:[%s288 + $0x10] sm:$0xff]
        %v338 = vld [vmem:[%s288 + $0x18] sm:$0xff]
        %v339 = vld [vmem:[%s288 + $0x20] sm:$0xff]
        %v340 = vld [vmem:[%s288 + $0x28] sm:$0xff]
        %v341 = vld [vmem:[%s288 + $0x30] sm:$0xff]
        %v342 = vld [vmem:[%s288 + $0x38] sm:$0xff]
        %v343 = vld [vmem:[%s288 + $0x40] sm:$0xff]
        %v344 = vld [vmem:[%s288 + $0x48] sm:$0xff]
        %v345 = vld [vmem:[%s288 + $0x50] sm:$0xff]
        %v346 = vld [vmem:[%s288 + $0x58] sm:$0xff]
        %v347 = vld [vmem:[%s288 + $0x60] sm:$0xff]
        %v348 = vld [vmem:[%s288 + $0x68] sm:$0xff]
        %v349 = vld [vmem:[%s288 + $0x70] sm:$0xff]
        %v350 = vld [vmem:[%s288 + $0x78] sm:$0xff]
        %v351 = vpack.c.bf16 %v336, %v335
        %v352 = vpack.c.bf16 %v338, %v337
        %v353 = vpack.c.bf16 %v340, %v339
        %v354 = vpack.c.bf16 %v342, %v341
        %v355 = vpack.c.bf16 %v344, %v343
        %v356 = vpack.c.bf16 %v346, %v345
        %v357 = vpack.c.bf16 %v348, %v347
        %v358 = vpack.c.bf16 %v350, %v349
        %v359 = vld [vmem:[#allocation8] sm:$0xff]
        %v360 = vld [vmem:[#allocation8 + $0x8] sm:$0xf]
        %v361 = vld [vmem:[#allocation8 + $0xc] sm:$0xff]
        %v362 = vld [vmem:[#allocation8 + $0x14] sm:$0xf]
        %v363 = vld [vmem:[#allocation8 + $0x18] sm:$0xff]
        %v364 = vld [vmem:[#allocation8 + $0x20] sm:$0xf]
        %v365 = vld [vmem:[#allocation8 + $0x24] sm:$0xff]
        %v366 = vld [vmem:[#allocation8 + $0x2c] sm:$0xf]
        %v367 = vld [vmem:[#allocation8 + $0x30] sm:$0xff]
        %v368 = vld [vmem:[#allocation8 + $0x38] sm:$0xf]
        %v369 = vld [vmem:[#allocation8 + $0x3c] sm:$0xff]
        %v370 = vld [vmem:[#allocation8 + $0x44] sm:$0xf]
        %v371 = vld [vmem:[#allocation8 + $0x48] sm:$0xff]
        %v372 = vld [vmem:[#allocation8 + $0x50] sm:$0xf]
        %v373 = vld [vmem:[#allocation8 + $0x54] sm:$0xff]
        %v374 = vld [vmem:[#allocation8 + $0x5c] sm:$0xf]
        %v375 = vld [vmem:[#allocation8 + $0x60] sm:$0xff]
        %v376 = vld [vmem:[#allocation8 + $0x68] sm:$0xf]
        %v377 = vld [vmem:[#allocation8 + $0x6c] sm:$0xff]
        %v378 = vld [vmem:[#allocation8 + $0x74] sm:$0xf]
        %v379 = vld [vmem:[#allocation8 + $0x78] sm:$0xff]
        %v380 = vld [vmem:[#allocation8 + $0x80] sm:$0xf]
        %v381 = vld [vmem:[#allocation8 + $0x84] sm:$0xff]
        %v382 = vld [vmem:[#allocation8 + $0x8c] sm:$0xf]
        %v383 = vld [vmem:[#allocation8 + $0x90] sm:$0xff]
        %v384 = vld [vmem:[#allocation8 + $0x98] sm:$0xf]
        %v385 = vld [vmem:[#allocation8 + $0x9c] sm:$0xff]
        %v386 = vld [vmem:[#allocation8 + $0xa4] sm:$0xf]
        %v387 = vld [vmem:[#allocation8 + $0xa8] sm:$0xff]
        %v388 = vld [vmem:[#allocation8 + $0xb0] sm:$0xf]
        %v389 = vld [vmem:[#allocation8 + $0xb4] sm:$0xff]
        %v390 = vld [vmem:[#allocation8 + $0xbc] sm:$0xf]
        %v391 = vld [vmem:[%s2] sm:$0x7]
        %v393 = vlaneseq
        %v394 = vshrl.u32 %v393, 7
        %v395 = vsub.s32 0, %v394
        %v396 = vrot.slane %v391, %v395
        %v397 = vlaneseq
        %v398 = vshrl.u32 %v397, 7
        %v399 = vsub.s32 1, %v398
        %v400 = vrot.slane %v391, %v399
        %v401 = vlaneseq
        %v402 = vshrl.u32 %v401, 7
        %v403 = vsub.s32 2, %v402
        %v404 = vrot.slane %v391, %v403
        %v440 = vunpack.c.l.b16 %v359
        %v441 = vunpack.c.h.b16 %v359
        %v442 = vunpack.c.l.b16 %v360
        %v443 = vunpack.c.l.b16 %v361
        %v444 = vunpack.c.h.b16 %v361
        %v445 = vunpack.c.l.b16 %v362
        %v446 = vunpack.c.l.b16 %v363
        %v447 = vunpack.c.h.b16 %v363
        %v448 = vunpack.c.l.b16 %v364
        %v449 = vunpack.c.l.b16 %v365
        %v450 = vunpack.c.h.b16 %v365
        %v451 = vunpack.c.l.b16 %v366
        %v452 = vunpack.c.l.b16 %v367
        %v453 = vunpack.c.h.b16 %v367
        %v454 = vunpack.c.l.b16 %v368
        %v455 = vunpack.c.l.b16 %v369
        %v456 = vunpack.c.h.b16 %v369
        %v457 = vunpack.c.l.b16 %v370
        %v458 = vunpack.c.l.b16 %v371
        %v459 = vunpack.c.h.b16 %v371
        %v460 = vunpack.c.l.b16 %v372
        %v461 = vunpack.c.l.b16 %v373
        %v462 = vunpack.c.h.b16 %v373
        %v463 = vunpack.c.l.b16 %v374
        %v464 = vunpack.c.l.b16 %v375
        %v465 = vunpack.c.h.b16 %v375
        %v466 = vunpack.c.l.b16 %v376
        %v467 = vunpack.c.l.b16 %v377
        %v468 = vunpack.c.h.b16 %v377
        %v469 = vunpack.c.l.b16 %v378
        %v470 = vunpack.c.l.b16 %v379
        %v471 = vunpack.c.h.b16 %v379
        %v472 = vunpack.c.l.b16 %v380
        %v473 = vunpack.c.l.b16 %v381
        %v474 = vunpack.c.h.b16 %v381
        %v475 = vunpack.c.l.b16 %v382
        %v476 = vunpack.c.l.b16 %v383
        %v477 = vunpack.c.h.b16 %v383
        %v478 = vunpack.c.l.b16 %v384
        %v479 = vunpack.c.l.b16 %v385
        %v480 = vunpack.c.h.b16 %v385
        %v481 = vunpack.c.l.b16 %v386
        %v482 = vunpack.c.l.b16 %v387
        %v483 = vunpack.c.h.b16 %v387
        %v484 = vunpack.c.l.b16 %v388
        %v485 = vunpack.c.l.b16 %v389
        %v486 = vunpack.c.h.b16 %v389
        %v487 = vunpack.c.l.b16 %v390
        %v488 = vpack.c.b16 %v443, %v440
        %v489 = vpack.c.b16 %v444, %v441
        %v490 = vpack.c.b16 %v445, %v442
        %v491 = vpack.c.b16 %v449, %v446
        %v492 = vpack.c.b16 %v450, %v447
        %v493 = vpack.c.b16 %v451, %v448
        %v494 = vpack.c.b16 %v455, %v452
        %v495 = vpack.c.b16 %v456, %v453
        %v496 = vpack.c.b16 %v457, %v454
        %v497 = vpack.c.b16 %v461, %v458
        %v498 = vpack.c.b16 %v462, %v459
        %v499 = vpack.c.b16 %v463, %v460
        %v500 = vpack.c.b16 %v467, %v464
        %v501 = vpack.c.b16 %v468, %v465
        %v502 = vpack.c.b16 %v469, %v466
        %v503 = vpack.c.b16 %v473, %v470
        %v504 = vpack.c.b16 %v474, %v471
        %v505 = vpack.c.b16 %v475, %v472
        %v506 = vpack.c.b16 %v479, %v476
        %v507 = vpack.c.b16 %v480, %v477
        %v508 = vpack.c.b16 %v481, %v478
        %v509 = vpack.c.b16 %v485, %v482
        %v510 = vpack.c.b16 %v486, %v483
        %v511 = vpack.c.b16 %v487, %v484
        %536 = vmatprep.subr.bf16.mxu0 %v489
        %537 = vmatpush1.bf16.msra.mxu0 %v488
        %538 = vmatprep.subr.bf16.mxu0 %v492
        %539 = vmatpush1.bf16.msra.mxu0 %v491
        %540 = vmatprep.subr.bf16.mxu0 %v495
        %541 = vmatpush1.bf16.msra.mxu0 %v494
        %542 = vmatprep.subr.bf16.mxu0 %v498
        %543 = vmatpush1.bf16.msra.mxu0 %v497
        %544 = vmatprep.subr.bf16.mxu0 %v501
        %545 = vmatpush1.bf16.msra.mxu0 %v500
        %546 = vmatprep.subr.bf16.mxu0 %v504
        %547 = vmatpush1.bf16.msra.mxu0 %v503
        %548 = vmatprep.subr.bf16.mxu0 %v507
        %549 = vmatpush1.bf16.msra.mxu0 %v506
        %550 = vmatprep.subr.bf16.mxu0 %v510
        %551 = vmatpush1.bf16.msra.mxu0 %v509
        %552 = vmatprep.subr.bf16.mxu0 0
        %553 = vmatpush1.bf16.msra.mxu0 0
        %554 = vmatprep.subr.bf16.mxu0 0
        %555 = vmatpush1.bf16.msra.mxu0 0
        %556 = vmatprep.subr.bf16.mxu0 0
        %557 = vmatpush1.bf16.msra.mxu0 0
        %558 = vmatprep.subr.bf16.mxu0 0
        %559 = vmatpush1.bf16.msra.mxu0 0
        %560 = vmatprep.subr.bf16.mxu0 0
        %561 = vmatpush1.bf16.msra.mxu0 0
        %562 = vmatprep.subr.bf16.mxu0 0
        %563 = vmatpush1.bf16.msra.mxu0 0
        %564 = vmatprep.subr.bf16.mxu0 0
        %565 = vmatpush1.bf16.msra.mxu0 0
        %566 = vmatprep.subr.bf16.mxu0 0
        %567 = vmatpush1.bf16.msra.mxu0 0
        %568 = vmatprep.mubr.bf16.mxu0 0
        %569 = vmatmul.mubr.bf16.gmra.mrb[0].mxu0 %v351
        %v570 = vpop.f32.mrb[0].mxu0
        %v571 = vadd.f32 %v396, %v570
        %v572 = vpop.f32.mrb[0].mxu0
        %v573 = vadd.f32 %v400, %v572
        %v574 = vpop.f32.mrb[0].mxu0
        %v575 = vadd.f32 %v396, %v574
        %v576 = vpop.f32.mrb[0].mxu0
        %v577 = vadd.f32 %v400, %v576
        %578 = vmatprep.mubr.bf16.mxu0 0
        %579 = vmatmul.mubr.bf16.gmra.mrb[0].mxu0 %v352
        %v580 = vpop.f32.mrb[0].mxu0
        %v581 = vadd.f32 %v396, %v580
        %v582 = vpop.f32.mrb[0].mxu0
        %v583 = vadd.f32 %v400, %v582
        %v584 = vpop.f32.mrb[0].mxu0
        %v585 = vadd.f32 %v396, %v584
        %v586 = vpop.f32.mrb[0].mxu0
        %v587 = vadd.f32 %v400, %v586
        %588 = vmatprep.mubr.bf16.mxu0 0
        %589 = vmatmul.mubr.bf16.gmra.mrb[0].mxu0 %v353
        %v590 = vpop.f32.mrb[0].mxu0
        %v591 = vadd.f32 %v396, %v590
        %v592 = vpop.f32.mrb[0].mxu0
        %v593 = vadd.f32 %v400, %v592
        %v594 = vpop.f32.mrb[0].mxu0
        %v595 = vadd.f32 %v396, %v594
        %v596 = vpop.f32.mrb[0].mxu0
        %v597 = vadd.f32 %v400, %v596
        %598 = vmatprep.mubr.bf16.mxu0 0
        %599 = vmatmul.mubr.bf16.gmra.mrb[0].mxu0 %v354
        %v600 = vpop.f32.mrb[0].mxu0
        %v601 = vadd.f32 %v396, %v600
        %v602 = vpop.f32.mrb[0].mxu0
        %v603 = vadd.f32 %v400, %v602
        %v604 = vpop.f32.mrb[0].mxu0
        %v605 = vadd.f32 %v396, %v604
        %v606 = vpop.f32.mrb[0].mxu0
        %v607 = vadd.f32 %v400, %v606
        %608 = vmatprep.mubr.bf16.mxu0 0
        %609 = vmatmul.mubr.bf16.gmra.mrb[0].mxu0 %v355
        %v610 = vpop.f32.mrb[0].mxu0
        %v611 = vadd.f32 %v396, %v610
        %v612 = vpop.f32.mrb[0].mxu0
        %v613 = vadd.f32 %v400, %v612
        %v614 = vpop.f32.mrb[0].mxu0
        %v615 = vadd.f32 %v396, %v614
        %v616 = vpop.f32.mrb[0].mxu0
        %v617 = vadd.f32 %v400, %v616
        %618 = vmatprep.mubr.bf16.mxu0 0
        %619 = vmatmul.mubr.bf16.gmra.mrb[0].mxu0 %v356
        %v620 = vpop.f32.mrb[0].mxu0
        %v621 = vadd.f32 %v396, %v620
        %v622 = vpop.f32.mrb[0].mxu0
        %v623 = vadd.f32 %v400, %v622
        %v624 = vpop.f32.mrb[0].mxu0
        %v625 = vadd.f32 %v396, %v624
        %v626 = vpop.f32.mrb[0].mxu0
        %v627 = vadd.f32 %v400, %v626
        %628 = vmatprep.mubr.bf16.mxu0 0
        %629 = vmatmul.mubr.bf16.gmra.mrb[0].mxu0 %v357
        %v630 = vpop.f32.mrb[0].mxu0
        %v631 = vadd.f32 %v396, %v630
        %v632 = vpop.f32.mrb[0].mxu0
        %v633 = vadd.f32 %v400, %v632
        %v634 = vpop.f32.mrb[0].mxu0
        %v635 = vadd.f32 %v396, %v634
        %v636 = vpop.f32.mrb[0].mxu0
        %v637 = vadd.f32 %v400, %v636
        %638 = vmatprep.mubr.bf16.mxu0 0
        %639 = vmatmul.mubr.bf16.gmra.mrb[0].mxu0 %v358
        %v640 = vpop.f32.mrb[0].mxu0
        %v641 = vadd.f32 %v396, %v640
        %v642 = vpop.f32.mrb[0].mxu0
        %v643 = vadd.f32 %v400, %v642
        %v644 = vpop.f32.mrb[0].mxu0
        %v645 = vadd.f32 %v396, %v644
        %v646 = vpop.f32.mrb[0].mxu0
        %v647 = vadd.f32 %v400, %v646
        %648 = vdwg.mxu0
        %649 = vmatprep.subr.bf16.mxu0 0
        %650 = vmatpush1.bf16.msra.mxu0 %v490
        %651 = vmatprep.subr.bf16.mxu0 0
        %652 = vmatpush1.bf16.msra.mxu0 %v493
        %653 = vmatprep.subr.bf16.mxu0 0
        %654 = vmatpush1.bf16.msra.mxu0 %v496
        %655 = vmatprep.subr.bf16.mxu0 0
        %656 = vmatpush1.bf16.msra.mxu0 %v499
        %657 = vmatprep.subr.bf16.mxu0 0
        %658 = vmatpush1.bf16.msra.mxu0 %v502
        %659 = vmatprep.subr.bf16.mxu0 0
        %660 = vmatpush1.bf16.msra.mxu0 %v505
        %661 = vmatprep.subr.bf16.mxu0 0
        %662 = vmatpush1.bf16.msra.mxu0 %v508
        %663 = vmatprep.subr.bf16.mxu0 0
        %664 = vmatpush1.bf16.msra.mxu0 %v511
        %665 = vmatprep.subr.bf16.mxu0 0
        %666 = vmatpush1.bf16.msra.mxu0 0
        %667 = vmatprep.subr.bf16.mxu0 0
        %668 = vmatpush1.bf16.msra.mxu0 0
        %669 = vmatprep.subr.bf16.mxu0 0
        %670 = vmatpush1.bf16.msra.mxu0 0
        %671 = vmatprep.subr.bf16.mxu0 0
        %672 = vmatpush1.bf16.msra.mxu0 0
        %673 = vmatprep.subr.bf16.mxu0 0
        %674 = vmatpush1.bf16.msra.mxu0 0
        %675 = vmatprep.subr.bf16.mxu0 0
        %676 = vmatpush1.bf16.msra.mxu0 0
        %677 = vmatprep.subr.bf16.mxu0 0
        %678 = vmatpush1.bf16.msra.mxu0 0
        %679 = vmatprep.subr.bf16.mxu0 0
        %680 = vmatpush1.bf16.msra.mxu0 0
        %681 = vmatprep.mubr.bf16.mxu0 0
        %682 = vmatmul.mubr.bf16.gmra.mrb[0].mxu0 %v351
        %v683 = vpop.f32.mrb[0].mxu0
        %v684 = vadd.f32 %v404, %v683
        %v685 = vpop.f32.mrb[0].mxu0
        %v686 = vpop.f32.mrb[0].mxu0
        %v687 = vadd.f32 %v404, %v686
        %v688 = vpop.f32.mrb[0].mxu0
        %689 = vmatprep.mubr.bf16.mxu0 0
        %690 = vmatmul.mubr.bf16.gmra.mrb[0].mxu0 %v352
        %v691 = vpop.f32.mrb[0].mxu0
        %v692 = vadd.f32 %v404, %v691
        %v693 = vpop.f32.mrb[0].mxu0
        %v694 = vpop.f32.mrb[0].mxu0
        %v695 = vadd.f32 %v404, %v694
        %v696 = vpop.f32.mrb[0].mxu0
        %697 = vmatprep.mubr.bf16.mxu0 0
        %698 = vmatmul.mubr.bf16.gmra.mrb[0].mxu0 %v353
        %v699 = vpop.f32.mrb[0].mxu0
        %v700 = vadd.f32 %v404, %v699
        %v701 = vpop.f32.mrb[0].mxu0
        %v702 = vpop.f32.mrb[0].mxu0
        %v703 = vadd.f32 %v404, %v702
        %v704 = vpop.f32.mrb[0].mxu0
        %705 = vmatprep.mubr.bf16.mxu0 0
        %706 = vmatmul.mubr.bf16.gmra.mrb[0].mxu0 %v354
        %v707 = vpop.f32.mrb[0].mxu0
        %v708 = vadd.f32 %v404, %v707
        %v709 = vpop.f32.mrb[0].mxu0
        %v710 = vpop.f32.mrb[0].mxu0
        %v711 = vadd.f32 %v404, %v710
        %v712 = vpop.f32.mrb[0].mxu0
        %713 = vmatprep.mubr.bf16.mxu0 0
        %714 = vmatmul.mubr.bf16.gmra.mrb[0].mxu0 %v355
        %v715 = vpop.f32.mrb[0].mxu0
        %v716 = vadd.f32 %v404, %v715
        %v717 = vpop.f32.mrb[0].mxu0
        %v718 = vpop.f32.mrb[0].mxu0
        %v719 = vadd.f32 %v404, %v718
        %v720 = vpop.f32.mrb[0].mxu0
        %721 = vmatprep.mubr.bf16.mxu0 0
        %722 = vmatmul.mubr.bf16.gmra.mrb[0].mxu0 %v356
        %v723 = vpop.f32.mrb[0].mxu0
        %v724 = vadd.f32 %v404, %v723
        %v725 = vpop.f32.mrb[0].mxu0
        %v726 = vpop.f32.mrb[0].mxu0
        %v727 = vadd.f32 %v404, %v726
        %v728 = vpop.f32.mrb[0].mxu0
        %729 = vmatprep.mubr.bf16.mxu0 0
        %730 = vmatmul.mubr.bf16.gmra.mrb[0].mxu0 %v357
        %v731 = vpop.f32.mrb[0].mxu0
        %v732 = vadd.f32 %v404, %v731
        %v733 = vpop.f32.mrb[0].mxu0
        %v734 = vpop.f32.mrb[0].mxu0
        %v735 = vadd.f32 %v404, %v734
        %v736 = vpop.f32.mrb[0].mxu0
        %737 = vmatprep.mubr.bf16.mxu0 0
        %738 = vmatmul.mubr.bf16.gmra.mrb[0].mxu0 %v358
        %v739 = vpop.f32.mrb[0].mxu0
        %v740 = vadd.f32 %v404, %v739
        %v741 = vpop.f32.mrb[0].mxu0
        %v742 = vpop.f32.mrb[0].mxu0
        %v743 = vadd.f32 %v404, %v742
        %v744 = vpop.f32.mrb[0].mxu0
        %745 = vdwg.mxu0
        %v746 = vpack.c.bf16 %v575, %v571
        %v747 = vpack.c.bf16 %v585, %v581
        %v748 = vpack.c.bf16 %v595, %v591
        %v749 = vpack.c.bf16 %v605, %v601
        %v750 = vpack.c.bf16 %v615, %v611
        %v751 = vpack.c.bf16 %v625, %v621
        %v752 = vpack.c.bf16 %v635, %v631
        %v753 = vpack.c.bf16 %v645, %v641
        %v754 = vpack.c.bf16 %v577, %v573
        %v755 = vpack.c.bf16 %v587, %v583
        %v756 = vpack.c.bf16 %v597, %v593
        %v757 = vpack.c.bf16 %v607, %v603
        %v758 = vpack.c.bf16 %v617, %v613
        %v759 = vpack.c.bf16 %v627, %v623
        %v760 = vpack.c.bf16 %v637, %v633
        %v761 = vpack.c.bf16 %v647, %v643
        %s762 = sshra.s32 %s334, 4
        %s763 = sand.u32 %s334, 15
        %s764 = smul.addr %s762, 8
        %s765 = scalar_lea.vmem [#allocation2], %s764
        %766 = vst [vmem:[%s765] sm:$0xff] %v754
        %767 = vst [vmem:[%s765 + $0x8] sm:$0xff] %v755
        %768 = vst [vmem:[%s765 + $0x10] sm:$0xff] %v756
        %769 = vst [vmem:[%s765 + $0x18] sm:$0xff] %v757
        %770 = vst [vmem:[%s765 + $0x20] sm:$0xff] %v758
        %771 = vst [vmem:[%s765 + $0x28] sm:$0xff] %v759
        %772 = vst [vmem:[%s765 + $0x30] sm:$0xff] %v760
        %773 = vst [vmem:[%s765 + $0x38] sm:$0xff] %v761
        %v774 = vpack.c.bf16 %v687, %v684
        %v775 = vpack.c.bf16 %v695, %v692
        %v776 = vpack.c.bf16 %v703, %v700
        %v777 = vpack.c.bf16 %v711, %v708
        %v778 = vpack.c.bf16 %v719, %v716
        %v779 = vpack.c.bf16 %v727, %v724
        %v780 = vpack.c.bf16 %v735, %v732
        %v781 = vpack.c.bf16 %v743, %v740
        %s782 = smul.addr %s762, 8
        %s783 = scalar_lea.vmem [#allocation3], %s782
        %784 = vst [vmem:[%s783] sm:$0xff] %v774
        %785 = vst [vmem:[%s783 + $0x8] sm:$0xff] %v775
        %786 = vst [vmem:[%s783 + $0x10] sm:$0xff] %v776
        %787 = vst [vmem:[%s783 + $0x18] sm:$0xff] %v777
        %788 = vst [vmem:[%s783 + $0x20] sm:$0xff] %v778
        %789 = vst [vmem:[%s783 + $0x28] sm:$0xff] %v779
        %790 = vst [vmem:[%s783 + $0x30] sm:$0xff] %v780
        %791 = vst [vmem:[%s783 + $0x38] sm:$0xff] %v781
        %s792 = sadd.s32 %s33, 1
        // While loop
        $region53: #{tpu_custom_call.1} parent=39 // loop_pre_header
          _
        $region54: #{tpu_custom_call.1} parent=39 // loop_header
          %s794 = sphi 0, %s796
          %p795 = scmp.ge.s32.totalorder %s794, %s792
        $region55: #{tpu_custom_call.1} parent=39 // loop_header_branch
          %798 = sbr.rel (%p795) target = $region59
        $region56: #{tpu_custom_call.1} parent=39 // loop_body
          %s799 = smul.u32 %s794, 128
          %s800 = sshra.s32 %s799, 4
          %s801 = sand.u32 %s799, 15
          %s802 = smul.addr %s800, 8
          %s803 = scalar_lea.vmem [#allocation2], %s802
          %v804 = vld [vmem:[%s803] sm:$0xff]
          %v805 = vld [vmem:[%s803 + $0x8] sm:$0xff]
          %v806 = vld [vmem:[%s803 + $0x10] sm:$0xff]
          %v807 = vld [vmem:[%s803 + $0x18] sm:$0xff]
          %v808 = vld [vmem:[%s803 + $0x20] sm:$0xff]
          %v809 = vld [vmem:[%s803 + $0x28] sm:$0xff]
          %v810 = vld [vmem:[%s803 + $0x30] sm:$0xff]
          %v811 = vld [vmem:[%s803 + $0x38] sm:$0xff]
          %812 = vmatprep.subr.bf16.mxu0 0
          %813 = vmatpush1.bf16.xpose.msra.mxu0 %v804
          %814 = vmatprep.subr.bf16.mxu0 0
          %815 = vmatpush1.bf16.xpose.msra.mxu0 %v805
          %816 = vmatprep.subr.bf16.mxu0 0
          %817 = vmatpush1.bf16.xpose.msra.mxu0 %v806
          %818 = vmatprep.subr.bf16.mxu0 0
          %819 = vmatpush1.bf16.xpose.msra.mxu0 %v807
          %820 = vmatprep.subr.bf16.mxu0 0
          %821 = vmatpush1.bf16.xpose.msra.mxu0 %v808
          %822 = vmatprep.subr.bf16.mxu0 0
          %823 = vmatpush1.bf16.xpose.msra.mxu0 %v809
          %824 = vmatprep.subr.bf16.mxu0 0
          %825 = vmatpush1.bf16.xpose.msra.mxu0 %v810
          %826 = vmatprep.subr.bf16.mxu0 0
          %827 = vmatpush1.bf16.xpose.msra.mxu0 %v811
          %828 = vmatprep.subr.bf16.mxu0 0
          %829 = vmatpush1.bf16.xpose.msra.mxu0 0
          %830 = vmatprep.subr.bf16.mxu0 0
          %831 = vmatpush1.bf16.xpose.msra.mxu0 0
          %832 = vmatprep.subr.bf16.mxu0 0
          %833 = vmatpush1.bf16.xpose.msra.mxu0 0
          %834 = vmatprep.subr.bf16.mxu0 0
          %835 = vmatpush1.bf16.xpose.msra.mxu0 0
          %836 = vmatprep.subr.bf16.mxu0 0
          %837 = vmatpush1.bf16.xpose.msra.mxu0 0
          %838 = vmatprep.subr.bf16.mxu0 0
          %839 = vmatpush1.bf16.xpose.msra.mxu0 0
          %840 = vmatprep.subr.bf16.mxu0 0
          %841 = vmatpush1.bf16.xpose.msra.mxu0 0
          %842 = vmatprep.subr.bf16.mxu0 0
          %843 = vmatpush1.bf16.xpose.msra.mxu0 0
          %844 = vmatprep.mubr.bf16.mxu0 0
          %845 = vmatmul.mubr.bf16.gmra.mrb[0].mxu0 %v746
          %v846 = vpop.f32.mrb[0].mxu0
          %v847 = vadd.f32 0.0, %v846
          %v848 = vpop.f32.mrb[0].mxu0
          %v849 = vpop.f32.mrb[0].mxu0
          %v850 = vadd.f32 0.0, %v849
          %v851 = vpop.f32.mrb[0].mxu0
          %852 = vmatprep.mubr.bf16.mxu0 0
          %853 = vmatmul.mubr.bf16.gmra.mrb[0].mxu0 %v747
          %v854 = vpop.f32.mrb[0].mxu0
          %v855 = vadd.f32 0.0, %v854
          %v856 = vpop.f32.mrb[0].mxu0
          %v857 = vpop.f32.mrb[0].mxu0
          %v858 = vadd.f32 0.0, %v857
          %v859 = vpop.f32.mrb[0].mxu0
          %860 = vmatprep.mubr.bf16.mxu0 0
          %861 = vmatmul.mubr.bf16.gmra.mrb[0].mxu0 %v748
          %v862 = vpop.f32.mrb[0].mxu0
          %v863 = vadd.f32 0.0, %v862
          %v864 = vpop.f32.mrb[0].mxu0
          %v865 = vpop.f32.mrb[0].mxu0
          %v866 = vadd.f32 0.0, %v865
          %v867 = vpop.f32.mrb[0].mxu0
          %868 = vmatprep.mubr.bf16.mxu0 0
          %869 = vmatmul.mubr.bf16.gmra.mrb[0].mxu0 %v749
          %v870 = vpop.f32.mrb[0].mxu0
          %v871 = vadd.f32 0.0, %v870
          %v872 = vpop.f32.mrb[0].mxu0
          %v873 = vpop.f32.mrb[0].mxu0
          %v874 = vadd.f32 0.0, %v873
          %v875 = vpop.f32.mrb[0].mxu0
          %876 = vmatprep.mubr.bf16.mxu0 0
          %877 = vmatmul.mubr.bf16.gmra.mrb[0].mxu0 %v750
          %v878 = vpop.f32.mrb[0].mxu0
          %v879 = vadd.f32 0.0, %v878
          %v880 = vpop.f32.mrb[0].mxu0
          %v881 = vpop.f32.mrb[0].mxu0
          %v882 = vadd.f32 0.0, %v881
          %v883 = vpop.f32.mrb[0].mxu0
          %884 = vmatprep.mubr.bf16.mxu0 0
          %885 = vmatmul.mubr.bf16.gmra.mrb[0].mxu0 %v751
          %v886 = vpop.f32.mrb[0].mxu0
          %v887 = vadd.f32 0.0, %v886
          %v888 = vpop.f32.mrb[0].mxu0
          %v889 = vpop.f32.mrb[0].mxu0
          %v890 = vadd.f32 0.0, %v889
          %v891 = vpop.f32.mrb[0].mxu0
          %892 = vmatprep.mubr.bf16.mxu0 0
          %893 = vmatmul.mubr.bf16.gmra.mrb[0].mxu0 %v752
          %v894 = vpop.f32.mrb[0].mxu0
          %v895 = vadd.f32 0.0, %v894
          %v896 = vpop.f32.mrb[0].mxu0
          %v897 = vpop.f32.mrb[0].mxu0
          %v898 = vadd.f32 0.0, %v897
          %v899 = vpop.f32.mrb[0].mxu0
          %900 = vmatprep.mubr.bf16.mxu0 0
          %901 = vmatmul.mubr.bf16.gmra.mrb[0].mxu0 %v753
          %v902 = vpop.f32.mrb[0].mxu0
          %v903 = vadd.f32 0.0, %v902
          %v904 = vpop.f32.mrb[0].mxu0
          %v905 = vpop.f32.mrb[0].mxu0
          %v906 = vadd.f32 0.0, %v905
          %v907 = vpop.f32.mrb[0].mxu0
          %908 = vdwg.mxu0
          %v909 = vlaneseq
          %v910 = vshrl.u32 %v909, 7
          %v911 = vadd.s32 %v910, 8
          %v912 = vadd.s32 %v910, 16
          %v913 = vadd.s32 %v910, 24
          %v914 = vadd.s32 %v910, 32
          %v915 = vadd.s32 %v910, 40
          %v916 = vadd.s32 %v910, 48
          %v917 = vadd.s32 %v910, 56
          %v918 = vadd.s32 %v910, 64
          %v919 = vadd.s32 %v910, 72
          %v920 = vadd.s32 %v910, 80
          %v921 = vadd.s32 %v910, 88
          %v922 = vadd.s32 %v910, 96
          %v923 = vadd.s32 %v910, 104
          %v924 = vadd.s32 %v910, 112
          %v925 = vadd.s32 %v910, 120
          %v926 = vstv %s334
          %v927 = vadd.s32 %v926, %v910
          %v928 = vadd.s32 %v926, %v911
          %v929 = vadd.s32 %v926, %v912
          %v930 = vadd.s32 %v926, %v913
          %v931 = vadd.s32 %v926, %v914
          %v932 = vadd.s32 %v926, %v915
          %v933 = vadd.s32 %v926, %v916
          %v934 = vadd.s32 %v926, %v917
          %v935 = vadd.s32 %v926, %v918
          %v936 = vadd.s32 %v926, %v919
          %v937 = vadd.s32 %v926, %v920
          %v938 = vadd.s32 %v926, %v921
          %v939 = vadd.s32 %v926, %v922
          %v940 = vadd.s32 %v926, %v923
          %v941 = vadd.s32 %v926, %v924
          %v942 = vadd.s32 %v926, %v925
          %v943 = vlaneseq
          %v944 = vand.u32 %v943, 127
          %v945 = vstv %s799
          %v946 = vadd.s32 %v945, %v944
          %vm947 = vcmp.le.s32.totalorder %v946, %v927
          %vm948 = vcmp.le.s32.totalorder %v946, %v928
          %vm949 = vcmp.le.s32.totalorder %v946, %v929
          %vm950 = vcmp.le.s32.totalorder %v946, %v930
          %vm951 = vcmp.le.s32.totalorder %v946, %v931
          %vm952 = vcmp.le.s32.totalorder %v946, %v932
          %vm953 = vcmp.le.s32.totalorder %v946, %v933
          %vm954 = vcmp.le.s32.totalorder %v946, %v934
          %vm955 = vcmp.le.s32.totalorder %v946, %v935
          %vm956 = vcmp.le.s32.totalorder %v946, %v936
          %vm957 = vcmp.le.s32.totalorder %v946, %v937
          %vm958 = vcmp.le.s32.totalorder %v946, %v938
          %vm959 = vcmp.le.s32.totalorder %v946, %v939
          %vm960 = vcmp.le.s32.totalorder %v946, %v940
          %vm961 = vcmp.le.s32.totalorder %v946, %v941
          %vm962 = vcmp.le.s32.totalorder %v946, %v942
          %v963 = vsel %vm947, %v847, -3.4028235e+38
          %v964 = vsel %vm948, %v850, -3.4028235e+38
          %v965 = vsel %vm949, %v855, -3.4028235e+38
          %v966 = vsel %vm950, %v858, -3.4028235e+38
          %v967 = vsel %vm951, %v863, -3.4028235e+38
          %v968 = vsel %vm952, %v866, -3.4028235e+38
          %v969 = vsel %vm953, %v871, -3.4028235e+38
          %v970 = vsel %vm954, %v874, -3.4028235e+38
          %v971 = vsel %vm955, %v879, -3.4028235e+38
          %v972 = vsel %vm956, %v882, -3.4028235e+38
          %v973 = vsel %vm957, %v887, -3.4028235e+38
          %v974 = vsel %vm958, %v890, -3.4028235e+38
          %v975 = vsel %vm959, %v895, -3.4028235e+38
          %v976 = vsel %vm960, %v898, -3.4028235e+38
          %v977 = vsel %vm961, %v903, -3.4028235e+38
          %v978 = vsel %vm962, %v906, -3.4028235e+38
          %s979 = sshra.s32 %s799, 7
          %s980 = sand.u32 %s799, 127
          %s981 = smul.addr %s979, 8
          %s982 = scalar_lea.vmem [#allocation4], %s981
          %983 = vst [vmem:[%s982] sm:$0xff] %v963
          %984 = vst [vmem:[%s982 + $0x10] sm:$0xff] %v964
          %985 = vst [vmem:[%s982 + $0x20] sm:$0xff] %v965
          %986 = vst [vmem:[%s982 + $0x30] sm:$0xff] %v966
          %987 = vst [vmem:[%s982 + $0x40] sm:$0xff] %v967
          %988 = vst [vmem:[%s982 + $0x50] sm:$0xff] %v968
          %989 = vst [vmem:[%s982 + $0x60] sm:$0xff] %v969
          %990 = vst [vmem:[%s982 + $0x70] sm:$0xff] %v970
          %991 = vst [vmem:[%s982 + $0x80] sm:$0xff] %v971
          %992 = vst [vmem:[%s982 + $0x90] sm:$0xff] %v972
          %993 = vst [vmem:[%s982 + $0xa0] sm:$0xff] %v973
          %994 = vst [vmem:[%s982 + $0xb0] sm:$0xff] %v974
          %995 = vst [vmem:[%s982 + $0xc0] sm:$0xff] %v975
          %996 = vst [vmem:[%s982 + $0xd0] sm:$0xff] %v976
          %997 = vst [vmem:[%s982 + $0xe0] sm:$0xff] %v977
          %998 = vst [vmem:[%s982 + $0xf0] sm:$0xff] %v978
        $region57: #{tpu_custom_call.1} parent=39 // loop_footer
          %s796 = sadd.s32 %s794, 1
        $region58: #{tpu_custom_call.1} parent=39 // loop_footer_branch
          %793 = sbr.rel target = $region54
        $region59: #{tpu_custom_call.1} parent=39 // loop_exit
          _
        // While loop
        $region60: #{tpu_custom_call.1} parent=39 // loop_pre_header
          _
        $region61: #{tpu_custom_call.1} parent=39 // loop_header
          %s1000 = sphi %s792, %s1002
          %p1001 = scmp.ge.s32.totalorder %s1000, 2
        $region62: #{tpu_custom_call.1} parent=39 // loop_header_branch
          %1004 = sbr.rel (%p1001) target = $region66
        $region63: #{tpu_custom_call.1} parent=39 // loop_body
          %s1005 = smul.u32 %s1000, 128
          %s1006 = sshra.s32 %s1005, 7
          %s1007 = sand.u32 %s1005, 127
          %s1008 = smul.addr %s1006, 8
          %s1009 = scalar_lea.vmem [#allocation4], %s1008
          %1010 = vst [vmem:[%s1009] sm:$0xff] -3.4028235e+38
          %1011 = vst [vmem:[%s1009 + $0x10] sm:$0xff] -3.4028235e+38
          %1012 = vst [vmem:[%s1009 + $0x20] sm:$0xff] -3.4028235e+38
          %1013 = vst [vmem:[%s1009 + $0x30] sm:$0xff] -3.4028235e+38
          %1014 = vst [vmem:[%s1009 + $0x40] sm:$0xff] -3.4028235e+38
          %1015 = vst [vmem:[%s1009 + $0x50] sm:$0xff] -3.4028235e+38
          %1016 = vst [vmem:[%s1009 + $0x60] sm:$0xff] -3.4028235e+38
          %1017 = vst [vmem:[%s1009 + $0x70] sm:$0xff] -3.4028235e+38
          %1018 = vst [vmem:[%s1009 + $0x80] sm:$0xff] -3.4028235e+38
          %1019 = vst [vmem:[%s1009 + $0x90] sm:$0xff] -3.4028235e+38
          %1020 = vst [vmem:[%s1009 + $0xa0] sm:$0xff] -3.4028235e+38
          %1021 = vst [vmem:[%s1009 + $0xb0] sm:$0xff] -3.4028235e+38
          %1022 = vst [vmem:[%s1009 + $0xc0] sm:$0xff] -3.4028235e+38
          %1023 = vst [vmem:[%s1009 + $0xd0] sm:$0xff] -3.4028235e+38
          %1024 = vst [vmem:[%s1009 + $0xe0] sm:$0xff] -3.4028235e+38
          %1025 = vst [vmem:[%s1009 + $0xf0] sm:$0xff] -3.4028235e+38
        $region64: #{tpu_custom_call.1} parent=39 // loop_footer
          %s1002 = sadd.s32 %s1000, 1
        $region65: #{tpu_custom_call.1} parent=39 // loop_footer_branch
          %999 = sbr.rel target = $region61
        $region66: #{tpu_custom_call.1} parent=39 // loop_exit
          _
        %v1026 = vld [vmem:[#allocation4] sm:$0xff]
        %v1027 = vld [vmem:[#allocation4 + $0x8] sm:$0xff]
        %v1028 = vld [vmem:[#allocation4 + $0x10] sm:$0xff]
        %v1029 = vld [vmem:[#allocation4 + $0x18] sm:$0xff]
        %v1030 = vld [vmem:[#allocation4 + $0x20] sm:$0xff]
        %v1031 = vld [vmem:[#allocation4 + $0x28] sm:$0xff]
        %v1032 = vld [vmem:[#allocation4 + $0x30] sm:$0xff]
        %v1033 = vld [vmem:[#allocation4 + $0x38] sm:$0xff]
        %v1034 = vld [vmem:[#allocation4 + $0x40] sm:$0xff]
        %v1035 = vld [vmem:[#allocation4 + $0x48] sm:$0xff]
        %v1036 = vld [vmem:[#allocation4 + $0x50] sm:$0xff]
        %v1037 = vld [vmem:[#allocation4 + $0x58] sm:$0xff]
        %v1038 = vld [vmem:[#allocation4 + $0x60] sm:$0xff]
        %v1039 = vld [vmem:[#allocation4 + $0x68] sm:$0xff]
        %v1040 = vld [vmem:[#allocation4 + $0x70] sm:$0xff]
        %v1041 = vld [vmem:[#allocation4 + $0x78] sm:$0xff]
        %v1042 = vld [vmem:[#allocation4 + $0x80] sm:$0xff]
        %v1043 = vld [vmem:[#allocation4 + $0x88] sm:$0xff]
        %v1044 = vld [vmem:[#allocation4 + $0x90] sm:$0xff]
        %v1045 = vld [vmem:[#allocation4 + $0x98] sm:$0xff]
        %v1046 = vld [vmem:[#allocation4 + $0xa0] sm:$0xff]
        %v1047 = vld [vmem:[#allocation4 + $0xa8] sm:$0xff]
        %v1048 = vld [vmem:[#allocation4 + $0xb0] sm:$0xff]
        %v1049 = vld [vmem:[#allocation4 + $0xb8] sm:$0xff]
        %v1050 = vld [vmem:[#allocation4 + $0xc0] sm:$0xff]
        %v1051 = vld [vmem:[#allocation4 + $0xc8] sm:$0xff]
        %v1052 = vld [vmem:[#allocation4 + $0xd0] sm:$0xff]
        %v1053 = vld [vmem:[#allocation4 + $0xd8] sm:$0xff]
        %v1054 = vld [vmem:[#allocation4 + $0xe0] sm:$0xff]
        %v1055 = vld [vmem:[#allocation4 + $0xe8] sm:$0xff]
        %v1056 = vld [vmem:[#allocation4 + $0xf0] sm:$0xff]
        %v1057 = vld [vmem:[#allocation4 + $0xf8] sm:$0xff]
        %v1058 = vmax.f32 %v1026, %v1027
        %1059 = vmax.xlane.f32.xlu0 %v1058
        %v1060 = vpop.xlane.xlu0 %1059
        %v1061 = vmax.f32 %v1028, %v1029
        %1062 = vmax.xlane.f32.xlu0 %v1061
        %v1063 = vpop.xlane.xlu0 %1062
        %v1064 = vmax.f32 %v1030, %v1031
        %1065 = vmax.xlane.f32.xlu0 %v1064
        %v1066 = vpop.xlane.xlu0 %1065
        %v1067 = vmax.f32 %v1032, %v1033
        %1068 = vmax.xlane.f32.xlu0 %v1067
        %v1069 = vpop.xlane.xlu0 %1068
        %v1070 = vmax.f32 %v1034, %v1035
        %1071 = vmax.xlane.f32.xlu0 %v1070
        %v1072 = vpop.xlane.xlu0 %1071
        %v1073 = vmax.f32 %v1036, %v1037
        %1074 = vmax.xlane.f32.xlu0 %v1073
        %v1075 = vpop.xlane.xlu0 %1074
        %v1076 = vmax.f32 %v1038, %v1039
        %1077 = vmax.xlane.f32.xlu0 %v1076
        %v1078 = vpop.xlane.xlu0 %1077
        %v1079 = vmax.f32 %v1040, %v1041
        %1080 = vmax.xlane.f32.xlu0 %v1079
        %v1081 = vpop.xlane.xlu0 %1080
        %v1082 = vmax.f32 %v1042, %v1043
        %1083 = vmax.xlane.f32.xlu0 %v1082
        %v1084 = vpop.xlane.xlu0 %1083
        %v1085 = vmax.f32 %v1044, %v1045
        %1086 = vmax.xlane.f32.xlu0 %v1085
        %v1087 = vpop.xlane.xlu0 %1086
        %v1088 = vmax.f32 %v1046, %v1047
        %1089 = vmax.xlane.f32.xlu0 %v1088
        %v1090 = vpop.xlane.xlu0 %1089
        %v1091 = vmax.f32 %v1048, %v1049
        %1092 = vmax.xlane.f32.xlu0 %v1091
        %v1093 = vpop.xlane.xlu0 %1092
        %v1094 = vmax.f32 %v1050, %v1051
        %1095 = vmax.xlane.f32.xlu0 %v1094
        %v1096 = vpop.xlane.xlu0 %1095
        %v1097 = vmax.f32 %v1052, %v1053
        %1098 = vmax.xlane.f32.xlu0 %v1097
        %v1099 = vpop.xlane.xlu0 %1098
        %v1100 = vmax.f32 %v1054, %v1055
        %1101 = vmax.xlane.f32.xlu0 %v1100
        %v1102 = vpop.xlane.xlu0 %1101
        %v1103 = vmax.f32 %v1056, %v1057
        %1104 = vmax.xlane.f32.xlu0 %v1103
        %v1105 = vpop.xlane.xlu0 %1104
        %v1106 = vsub.f32 %v1026, %v1060
        %v1107 = vsub.f32 %v1027, %v1060
        %v1108 = vsub.f32 %v1028, %v1063
        %v1109 = vsub.f32 %v1029, %v1063
        %v1110 = vsub.f32 %v1030, %v1066
        %v1111 = vsub.f32 %v1031, %v1066
        %v1112 = vsub.f32 %v1032, %v1069
        %v1113 = vsub.f32 %v1033, %v1069
        %v1114 = vsub.f32 %v1034, %v1072
        %v1115 = vsub.f32 %v1035, %v1072
        %v1116 = vsub.f32 %v1036, %v1075
        %v1117 = vsub.f32 %v1037, %v1075
        %v1118 = vsub.f32 %v1038, %v1078
        %v1119 = vsub.f32 %v1039, %v1078
        %v1120 = vsub.f32 %v1040, %v1081
        %v1121 = vsub.f32 %v1041, %v1081
        %v1122 = vsub.f32 %v1042, %v1084
        %v1123 = vsub.f32 %v1043, %v1084
        %v1124 = vsub.f32 %v1044, %v1087
        %v1125 = vsub.f32 %v1045, %v1087
        %v1126 = vsub.f32 %v1046, %v1090
        %v1127 = vsub.f32 %v1047, %v1090
        %v1128 = vsub.f32 %v1048, %v1093
        %v1129 = vsub.f32 %v1049, %v1093
        %v1130 = vsub.f32 %v1050, %v1096
        %v1131 = vsub.f32 %v1051, %v1096
        %v1132 = vsub.f32 %v1052, %v1099
        %v1133 = vsub.f32 %v1053, %v1099
        %v1134 = vsub.f32 %v1054, %v1102
        %v1135 = vsub.f32 %v1055, %v1102
        %v1136 = vsub.f32 %v1056, %v1105
        %v1137 = vsub.f32 %v1057, %v1105
        %v1138 = vmul.f32 %v1106, 1.442695
        %v1139 = vpow.pop %v1138
        %v1140 = vmul.f32 %v1107, 1.442695
        %v1141 = vpow.pop %v1140
        %v1142 = vmul.f32 %v1108, 1.442695
        %v1143 = vpow.pop %v1142
        %v1144 = vmul.f32 %v1109, 1.442695
        %v1145 = vpow.pop %v1144
        %v1146 = vmul.f32 %v1110, 1.442695
        %v1147 = vpow.pop %v1146
        %v1148 = vmul.f32 %v1111, 1.442695
        %v1149 = vpow.pop %v1148
        %v1150 = vmul.f32 %v1112, 1.442695
        %v1151 = vpow.pop %v1150
        %v1152 = vmul.f32 %v1113, 1.442695
        %v1153 = vpow.pop %v1152
        %v1154 = vmul.f32 %v1114, 1.442695
        %v1155 = vpow.pop %v1154
        %v1156 = vmul.f32 %v1115, 1.442695
        %v1157 = vpow.pop %v1156
        %v1158 = vmul.f32 %v1116, 1.442695
        %v1159 = vpow.pop %v1158
        %v1160 = vmul.f32 %v1117, 1.442695
        %v1161 = vpow.pop %v1160
        %v1162 = vmul.f32 %v1118, 1.442695
        %v1163 = vpow.pop %v1162
        %v1164 = vmul.f32 %v1119, 1.442695
        %v1165 = vpow.pop %v1164
        %v1166 = vmul.f32 %v1120, 1.442695
        %v1167 = vpow.pop %v1166
        %v1168 = vmul.f32 %v1121, 1.442695
        %v1169 = vpow.pop %v1168
        %v1170 = vmul.f32 %v1122, 1.442695
        %v1171 = vpow.pop %v1170
        %v1172 = vmul.f32 %v1123, 1.442695
        %v1173 = vpow.pop %v1172
        %v1174 = vmul.f32 %v1124, 1.442695
        %v1175 = vpow.pop %v1174
        %v1176 = vmul.f32 %v1125, 1.442695
        %v1177 = vpow.pop %v1176
        %v1178 = vmul.f32 %v1126, 1.442695
        %v1179 = vpow.pop %v1178
        %v1180 = vmul.f32 %v1127, 1.442695
        %v1181 = vpow.pop %v1180
        %v1182 = vmul.f32 %v1128, 1.442695
        %v1183 = vpow.pop %v1182
        %v1184 = vmul.f32 %v1129, 1.442695
        %v1185 = vpow.pop %v1184
        %v1186 = vmul.f32 %v1130, 1.442695
        %v1187 = vpow.pop %v1186
        %v1188 = vmul.f32 %v1131, 1.442695
        %v1189 = vpow.pop %v1188
        %v1190 = vmul.f32 %v1132, 1.442695
        %v1191 = vpow.pop %v1190
        %v1192 = vmul.f32 %v1133, 1.442695
        %v1193 = vpow.pop %v1192
        %v1194 = vmul.f32 %v1134, 1.442695
        %v1195 = vpow.pop %v1194
        %v1196 = vmul.f32 %v1135, 1.442695
        %v1197 = vpow.pop %v1196
        %v1198 = vmul.f32 %v1136, 1.442695
        %v1199 = vpow.pop %v1198
        %v1200 = vmul.f32 %v1137, 1.442695
        %v1201 = vpow.pop %v1200
        %v1202 = vadd.f32 %v1139, %v1141
        %1203 = vadd.xlane.f32.xlu0 %v1202
        %v1204 = vpop.xlane.xlu0 %1203
        %v1205 = vadd.f32 %v1143, %v1145
        %1206 = vadd.xlane.f32.xlu0 %v1205
        %v1207 = vpop.xlane.xlu0 %1206
        %v1208 = vadd.f32 %v1147, %v1149
        %1209 = vadd.xlane.f32.xlu0 %v1208
        %v1210 = vpop.xlane.xlu0 %1209
        %v1211 = vadd.f32 %v1151, %v1153
        %1212 = vadd.xlane.f32.xlu0 %v1211
        %v1213 = vpop.xlane.xlu0 %1212
        %v1214 = vadd.f32 %v1155, %v1157
        %1215 = vadd.xlane.f32.xlu0 %v1214
        %v1216 = vpop.xlane.xlu0 %1215
        %v1217 = vadd.f32 %v1159, %v1161
        %1218 = vadd.xlane.f32.xlu0 %v1217
        %v1219 = vpop.xlane.xlu0 %1218
        %v1220 = vadd.f32 %v1163, %v1165
        %1221 = vadd.xlane.f32.xlu0 %v1220
        %v1222 = vpop.xlane.xlu0 %1221
        %v1223 = vadd.f32 %v1167, %v1169
        %1224 = vadd.xlane.f32.xlu0 %v1223
        %v1225 = vpop.xlane.xlu0 %1224
        %v1226 = vadd.f32 %v1171, %v1173
        %1227 = vadd.xlane.f32.xlu0 %v1226
        %v1228 = vpop.xlane.xlu0 %1227
        %v1229 = vadd.f32 %v1175, %v1177
        %1230 = vadd.xlane.f32.xlu0 %v1229
        %v1231 = vpop.xlane.xlu0 %1230
        %v1232 = vadd.f32 %v1179, %v1181
        %1233 = vadd.xlane.f32.xlu0 %v1232
        %v1234 = vpop.xlane.xlu0 %1233
        %v1235 = vadd.f32 %v1183, %v1185
        %1236 = vadd.xlane.f32.xlu0 %v1235
        %v1237 = vpop.xlane.xlu0 %1236
        %v1238 = vadd.f32 %v1187, %v1189
        %1239 = vadd.xlane.f32.xlu0 %v1238
        %v1240 = vpop.xlane.xlu0 %1239
        %v1241 = vadd.f32 %v1191, %v1193
        %1242 = vadd.xlane.f32.xlu0 %v1241
        %v1243 = vpop.xlane.xlu0 %1242
        %v1244 = vadd.f32 %v1195, %v1197
        %1245 = vadd.xlane.f32.xlu0 %v1244
        %v1246 = vpop.xlane.xlu0 %1245
        %v1247 = vadd.f32 %v1199, %v1201
        %1248 = vadd.xlane.f32.xlu0 %v1247
        %v1249 = vpop.xlane.xlu0 %1248
        %v1250 = vrcp.pop %v1204
        %v1251 = vmul.f32 %v1139, %v1250
        %v1252 = vmul.f32 %v1141, %v1250
        %v1253 = vrcp.pop %v1207
        %v1254 = vmul.f32 %v1143, %v1253
        %v1255 = vmul.f32 %v1145, %v1253
        %v1256 = vrcp.pop %v1210
        %v1257 = vmul.f32 %v1147, %v1256
        %v1258 = vmul.f32 %v1149, %v1256
        %v1259 = vrcp.pop %v1213
        %v1260 = vmul.f32 %v1151, %v1259
        %v1261 = vmul.f32 %v1153, %v1259
        %v1262 = vrcp.pop %v1216
        %v1263 = vmul.f32 %v1155, %v1262
        %v1264 = vmul.f32 %v1157, %v1262
        %v1265 = vrcp.pop %v1219
        %v1266 = vmul.f32 %v1159, %v1265
        %v1267 = vmul.f32 %v1161, %v1265
        %v1268 = vrcp.pop %v1222
        %v1269 = vmul.f32 %v1163, %v1268
        %v1270 = vmul.f32 %v1165, %v1268
        %v1271 = vrcp.pop %v1225
        %v1272 = vmul.f32 %v1167, %v1271
        %v1273 = vmul.f32 %v1169, %v1271
        %v1274 = vrcp.pop %v1228
        %v1275 = vmul.f32 %v1171, %v1274
        %v1276 = vmul.f32 %v1173, %v1274
        %v1277 = vrcp.pop %v1231
        %v1278 = vmul.f32 %v1175, %v1277
        %v1279 = vmul.f32 %v1177, %v1277
        %v1280 = vrcp.pop %v1234
        %v1281 = vmul.f32 %v1179, %v1280
        %v1282 = vmul.f32 %v1181, %v1280
        %v1283 = vrcp.pop %v1237
        %v1284 = vmul.f32 %v1183, %v1283
        %v1285 = vmul.f32 %v1185, %v1283
        %v1286 = vrcp.pop %v1240
        %v1287 = vmul.f32 %v1187, %v1286
        %v1288 = vmul.f32 %v1189, %v1286
        %v1289 = vrcp.pop %v1243
        %v1290 = vmul.f32 %v1191, %v1289
        %v1291 = vmul.f32 %v1193, %v1289
        %v1292 = vrcp.pop %v1246
        %v1293 = vmul.f32 %v1195, %v1292
        %v1294 = vmul.f32 %v1197, %v1292
        %v1295 = vrcp.pop %v1249
        %v1296 = vmul.f32 %v1199, %v1295
        %v1297 = vmul.f32 %v1201, %v1295
        %1298 = vst [vmem:[%s329] sm:$0xff] %v1251
        %1299 = vst [vmem:[%s329 + $0x8] sm:$0xff] %v1252
        %1300 = vst [vmem:[%s329 + $0x10] sm:$0xff] %v1254
        %1301 = vst [vmem:[%s329 + $0x18] sm:$0xff] %v1255
        %1302 = vst [vmem:[%s329 + $0x20] sm:$0xff] %v1257
        %1303 = vst [vmem:[%s329 + $0x28] sm:$0xff] %v1258
        %1304 = vst [vmem:[%s329 + $0x30] sm:$0xff] %v1260
        %1305 = vst [vmem:[%s329 + $0x38] sm:$0xff] %v1261
        %1306 = vst [vmem:[%s329 + $0x40] sm:$0xff] %v1263
        %1307 = vst [vmem:[%s329 + $0x48] sm:$0xff] %v1264
        %1308 = vst [vmem:[%s329 + $0x50] sm:$0xff] %v1266
        %1309 = vst [vmem:[%s329 + $0x58] sm:$0xff] %v1267
        %1310 = vst [vmem:[%s329 + $0x60] sm:$0xff] %v1269
        %1311 = vst [vmem:[%s329 + $0x68] sm:$0xff] %v1270
        %1312 = vst [vmem:[%s329 + $0x70] sm:$0xff] %v1272
        %1313 = vst [vmem:[%s329 + $0x78] sm:$0xff] %v1273
        %1314 = vst [vmem:[%s329 + $0x80] sm:$0xff] %v1275
        %1315 = vst [vmem:[%s329 + $0x88] sm:$0xff] %v1276
        %1316 = vst [vmem:[%s329 + $0x90] sm:$0xff] %v1278
        %1317 = vst [vmem:[%s329 + $0x98] sm:$0xff] %v1279
        %1318 = vst [vmem:[%s329 + $0xa0] sm:$0xff] %v1281
        %1319 = vst [vmem:[%s329 + $0xa8] sm:$0xff] %v1282
        %1320 = vst [vmem:[%s329 + $0xb0] sm:$0xff] %v1284
        %1321 = vst [vmem:[%s329 + $0xb8] sm:$0xff] %v1285
        %1322 = vst [vmem:[%s329 + $0xc0] sm:$0xff] %v1287
        %1323 = vst [vmem:[%s329 + $0xc8] sm:$0xff] %v1288
        %1324 = vst [vmem:[%s329 + $0xd0] sm:$0xff] %v1290
        %1325 = vst [vmem:[%s329 + $0xd8] sm:$0xff] %v1291
        %1326 = vst [vmem:[%s329 + $0xe0] sm:$0xff] %v1293
        %1327 = vst [vmem:[%s329 + $0xe8] sm:$0xff] %v1294
        %1328 = vst [vmem:[%s329 + $0xf0] sm:$0xff] %v1296
        %1329 = vst [vmem:[%s329 + $0xf8] sm:$0xff] %v1297
        %1330 = vst [vmem:[#allocation4] sm:$0xff] %v1251
        %1331 = vst [vmem:[#allocation4 + $0x8] sm:$0xff] %v1252
        %1332 = vst [vmem:[#allocation4 + $0x10] sm:$0xff] %v1254
        %1333 = vst [vmem:[#allocation4 + $0x18] sm:$0xff] %v1255
        %1334 = vst [vmem:[#allocation4 + $0x20] sm:$0xff] %v1257
        %1335 = vst [vmem:[#allocation4 + $0x28] sm:$0xff] %v1258
        %1336 = vst [vmem:[#allocation4 + $0x30] sm:$0xff] %v1260
        %1337 = vst [vmem:[#allocation4 + $0x38] sm:$0xff] %v1261
        %1338 = vst [vmem:[#allocation4 + $0x40] sm:$0xff] %v1263
        %1339 = vst [vmem:[#allocation4 + $0x48] sm:$0xff] %v1264
        %1340 = vst [vmem:[#allocation4 + $0x50] sm:$0xff] %v1266
        %1341 = vst [vmem:[#allocation4 + $0x58] sm:$0xff] %v1267
        %1342 = vst [vmem:[#allocation4 + $0x60] sm:$0xff] %v1269
        %1343 = vst [vmem:[#allocation4 + $0x68] sm:$0xff] %v1270
        %1344 = vst [vmem:[#allocation4 + $0x70] sm:$0xff] %v1272
        %1345 = vst [vmem:[#allocation4 + $0x78] sm:$0xff] %v1273
        %1346 = vst [vmem:[#allocation4 + $0x80] sm:$0xff] %v1275
        %1347 = vst [vmem:[#allocation4 + $0x88] sm:$0xff] %v1276
        %1348 = vst [vmem:[#allocation4 + $0x90] sm:$0xff] %v1278
        %1349 = vst [vmem:[#allocation4 + $0x98] sm:$0xff] %v1279
        %1350 = vst [vmem:[#allocation4 + $0xa0] sm:$0xff] %v1281
        %1351 = vst [vmem:[#allocation4 + $0xa8] sm:$0xff] %v1282
        %1352 = vst [vmem:[#allocation4 + $0xb0] sm:$0xff] %v1284
        %1353 = vst [vmem:[#allocation4 + $0xb8] sm:$0xff] %v1285
        %1354 = vst [vmem:[#allocation4 + $0xc0] sm:$0xff] %v1287
        %1355 = vst [vmem:[#allocation4 + $0xc8] sm:$0xff] %v1288
        %1356 = vst [vmem:[#allocation4 + $0xd0] sm:$0xff] %v1290
        %1357 = vst [vmem:[#allocation4 + $0xd8] sm:$0xff] %v1291
        %1358 = vst [vmem:[#allocation4 + $0xe0] sm:$0xff] %v1293
        %1359 = vst [vmem:[#allocation4 + $0xe8] sm:$0xff] %v1294
        %1360 = vst [vmem:[#allocation4 + $0xf0] sm:$0xff] %v1296
        %1361 = vst [vmem:[#allocation4 + $0xf8] sm:$0xff] %v1297
        // While loop
        $region67: #{tpu_custom_call.1} parent=39 // loop_pre_header
          _
        $region68: #{tpu_custom_call.1} parent=39 // loop_header
          %s1363 = sphi 0, %s1365
          %p1364 = scmp.ge.s32.totalorder %s1363, %s792
          %v1368 = vphi 0.0, %v1522
          %v1369 = vphi 0.0, %v1523
          %v1370 = vphi 0.0, %v1524
          %v1371 = vphi 0.0, %v1525
          %v1372 = vphi 0.0, %v1526
          %v1373 = vphi 0.0, %v1527
          %v1374 = vphi 0.0, %v1528
          %v1375 = vphi 0.0, %v1529
          %v1376 = vphi 0.0, %v1530
          %v1377 = vphi 0.0, %v1531
          %v1378 = vphi 0.0, %v1532
          %v1379 = vphi 0.0, %v1533
          %v1380 = vphi 0.0, %v1534
          %v1381 = vphi 0.0, %v1535
          %v1382 = vphi 0.0, %v1536
          %v1383 = vphi 0.0, %v1537
        $region69: #{tpu_custom_call.1} parent=39 // loop_header_branch
          %1367 = sbr.rel (%p1364) target = $region73
        $region70: #{tpu_custom_call.1} parent=39 // loop_body
          %s1384 = smul.u32 %s1363, 128
          %s1385 = sshra.s32 %s1384, 7
          %s1386 = sand.u32 %s1384, 127
          %s1387 = smul.addr %s1385, 8
          %s1388 = scalar_lea.vmem [#allocation4], %s1387
          %v1389 = vld [vmem:[%s1388] sm:$0xff]
          %v1390 = vld [vmem:[%s1388 + $0x10] sm:$0xff]
          %v1391 = vld [vmem:[%s1388 + $0x20] sm:$0xff]
          %v1392 = vld [vmem:[%s1388 + $0x30] sm:$0xff]
          %v1393 = vld [vmem:[%s1388 + $0x40] sm:$0xff]
          %v1394 = vld [vmem:[%s1388 + $0x50] sm:$0xff]
          %v1395 = vld [vmem:[%s1388 + $0x60] sm:$0xff]
          %v1396 = vld [vmem:[%s1388 + $0x70] sm:$0xff]
          %v1397 = vld [vmem:[%s1388 + $0x80] sm:$0xff]
          %v1398 = vld [vmem:[%s1388 + $0x90] sm:$0xff]
          %v1399 = vld [vmem:[%s1388 + $0xa0] sm:$0xff]
          %v1400 = vld [vmem:[%s1388 + $0xb0] sm:$0xff]
          %v1401 = vld [vmem:[%s1388 + $0xc0] sm:$0xff]
          %v1402 = vld [vmem:[%s1388 + $0xd0] sm:$0xff]
          %v1403 = vld [vmem:[%s1388 + $0xe0] sm:$0xff]
          %v1404 = vld [vmem:[%s1388 + $0xf0] sm:$0xff]
          %v1405 = vpack.c.bf16 %v1390, %v1389
          %v1406 = vpack.c.bf16 %v1392, %v1391
          %v1407 = vpack.c.bf16 %v1394, %v1393
          %v1408 = vpack.c.bf16 %v1396, %v1395
          %v1409 = vpack.c.bf16 %v1398, %v1397
          %v1410 = vpack.c.bf16 %v1400, %v1399
          %v1411 = vpack.c.bf16 %v1402, %v1401
          %v1412 = vpack.c.bf16 %v1404, %v1403
          %s1413 = sshra.s32 %s1384, 4
          %s1414 = sand.u32 %s1384, 15
          %s1415 = smul.addr %s1413, 8
          %s1416 = scalar_lea.vmem [#allocation3], %s1415
          %v1417 = vld [vmem:[%s1416] sm:$0xff]
          %v1418 = vld [vmem:[%s1416 + $0x8] sm:$0xff]
          %v1419 = vld [vmem:[%s1416 + $0x10] sm:$0xff]
          %v1420 = vld [vmem:[%s1416 + $0x18] sm:$0xff]
          %v1421 = vld [vmem:[%s1416 + $0x20] sm:$0xff]
          %v1422 = vld [vmem:[%s1416 + $0x28] sm:$0xff]
          %v1423 = vld [vmem:[%s1416 + $0x30] sm:$0xff]
          %v1424 = vld [vmem:[%s1416 + $0x38] sm:$0xff]
          %1425 = vmatprep.subr.bf16.mxu0 0
          %1426 = vmatpush1.bf16.msra.mxu0 %v1417
          %1427 = vmatprep.subr.bf16.mxu0 0
          %1428 = vmatpush1.bf16.msra.mxu0 %v1418
          %1429 = vmatprep.subr.bf16.mxu0 0
          %1430 = vmatpush1.bf16.msra.mxu0 %v1419
          %1431 = vmatprep.subr.bf16.mxu0 0
          %1432 = vmatpush1.bf16.msra.mxu0 %v1420
          %1433 = vmatprep.subr.bf16.mxu0 0
          %1434 = vmatpush1.bf16.msra.mxu0 %v1421
          %1435 = vmatprep.subr.bf16.mxu0 0
          %1436 = vmatpush1.bf16.msra.mxu0 %v1422
          %1437 = vmatprep.subr.bf16.mxu0 0
          %1438 = vmatpush1.bf16.msra.mxu0 %v1423
          %1439 = vmatprep.subr.bf16.mxu0 0
          %1440 = vmatpush1.bf16.msra.mxu0 %v1424
          %1441 = vmatprep.subr.bf16.mxu0 0
          %1442 = vmatpush1.bf16.msra.mxu0 0
          %1443 = vmatprep.subr.bf16.mxu0 0
          %1444 = vmatpush1.bf16.msra.mxu0 0
          %1445 = vmatprep.subr.bf16.mxu0 0
          %1446 = vmatpush1.bf16.msra.mxu0 0
          %1447 = vmatprep.subr.bf16.mxu0 0
          %1448 = vmatpush1.bf16.msra.mxu0 0
          %1449 = vmatprep.subr.bf16.mxu0 0
          %1450 = vmatpush1.bf16.msra.mxu0 0
          %1451 = vmatprep.subr.bf16.mxu0 0
          %1452 = vmatpush1.bf16.msra.mxu0 0
          %1453 = vmatprep.subr.bf16.mxu0 0
          %1454 = vmatpush1.bf16.msra.mxu0 0
          %1455 = vmatprep.subr.bf16.mxu0 0
          %1456 = vmatpush1.bf16.msra.mxu0 0
          %1457 = vmatprep.mubr.bf16.mxu0 0
          %1458 = vmatmul.mubr.bf16.gmra.mrb[0].mxu0 %v1405
          %v1459 = vpop.f32.mrb[0].mxu0
          %v1460 = vadd.f32 0.0, %v1459
          %v1461 = vpop.f32.mrb[0].mxu0
          %v1462 = vpop.f32.mrb[0].mxu0
          %v1463 = vadd.f32 0.0, %v1462
          %v1464 = vpop.f32.mrb[0].mxu0
          %1465 = vmatprep.mubr.bf16.mxu0 0
          %1466 = vmatmul.mubr.bf16.gmra.mrb[0].mxu0 %v1406
          %v1467 = vpop.f32.mrb[0].mxu0
          %v1468 = vadd.f32 0.0, %v1467
          %v1469 = vpop.f32.mrb[0].mxu0
          %v1470 = vpop.f32.mrb[0].mxu0
          %v1471 = vadd.f32 0.0, %v1470
          %v1472 = vpop.f32.mrb[0].mxu0
          %1473 = vmatprep.mubr.bf16.mxu0 0
          %1474 = vmatmul.mubr.bf16.gmra.mrb[0].mxu0 %v1407
          %v1475 = vpop.f32.mrb[0].mxu0
          %v1476 = vadd.f32 0.0, %v1475
          %v1477 = vpop.f32.mrb[0].mxu0
          %v1478 = vpop.f32.mrb[0].mxu0
          %v1479 = vadd.f32 0.0, %v1478
          %v1480 = vpop.f32.mrb[0].mxu0
          %1481 = vmatprep.mubr.bf16.mxu0 0
          %1482 = vmatmul.mubr.bf16.gmra.mrb[0].mxu0 %v1408
          %v1483 = vpop.f32.mrb[0].mxu0
          %v1484 = vadd.f32 0.0, %v1483
          %v1485 = vpop.f32.mrb[0].mxu0
          %v1486 = vpop.f32.mrb[0].mxu0
          %v1487 = vadd.f32 0.0, %v1486
          %v1488 = vpop.f32.mrb[0].mxu0
          %1489 = vmatprep.mubr.bf16.mxu0 0
          %1490 = vmatmul.mubr.bf16.gmra.mrb[0].mxu0 %v1409
          %v1491 = vpop.f32.mrb[0].mxu0
          %v1492 = vadd.f32 0.0, %v1491
          %v1493 = vpop.f32.mrb[0].mxu0
          %v1494 = vpop.f32.mrb[0].mxu0
          %v1495 = vadd.f32 0.0, %v1494
          %v1496 = vpop.f32.mrb[0].mxu0
          %1497 = vmatprep.mubr.bf16.mxu0 0
          %1498 = vmatmul.mubr.bf16.gmra.mrb[0].mxu0 %v1410
          %v1499 = vpop.f32.mrb[0].mxu0
          %v1500 = vadd.f32 0.0, %v1499
          %v1501 = vpop.f32.mrb[0].mxu0
          %v1502 = vpop.f32.mrb[0].mxu0
          %v1503 = vadd.f32 0.0, %v1502
          %v1504 = vpop.f32.mrb[0].mxu0
          %1505 = vmatprep.mubr.bf16.mxu0 0
          %1506 = vmatmul.mubr.bf16.gmra.mrb[0].mxu0 %v1411
          %v1507 = vpop.f32.mrb[0].mxu0
          %v1508 = vadd.f32 0.0, %v1507
          %v1509 = vpop.f32.mrb[0].mxu0
          %v1510 = vpop.f32.mrb[0].mxu0
          %v1511 = vadd.f32 0.0, %v1510
          %v1512 = vpop.f32.mrb[0].mxu0
          %1513 = vmatprep.mubr.bf16.mxu0 0
          %1514 = vmatmul.mubr.bf16.gmra.mrb[0].mxu0 %v1412
          %v1515 = vpop.f32.mrb[0].mxu0
          %v1516 = vadd.f32 0.0, %v1515
          %v1517 = vpop.f32.mrb[0].mxu0
          %v1518 = vpop.f32.mrb[0].mxu0
          %v1519 = vadd.f32 0.0, %v1518
          %v1520 = vpop.f32.mrb[0].mxu0
          %1521 = vdwg.mxu0
          %v1522 = vadd.f32 %v1368, %v1460
          %v1523 = vadd.f32 %v1369, %v1463
          %v1524 = vadd.f32 %v1370, %v1468
          %v1525 = vadd.f32 %v1371, %v1471
          %v1526 = vadd.f32 %v1372, %v1476
          %v1527 = vadd.f32 %v1373, %v1479
          %v1528 = vadd.f32 %v1374, %v1484
          %v1529 = vadd.f32 %v1375, %v1487
          %v1530 = vadd.f32 %v1376, %v1492
          %v1531 = vadd.f32 %v1377, %v1495
          %v1532 = vadd.f32 %v1378, %v1500
          %v1533 = vadd.f32 %v1379, %v1503
          %v1534 = vadd.f32 %v1380, %v1508
          %v1535 = vadd.f32 %v1381, %v1511
          %v1536 = vadd.f32 %v1382, %v1516
          %v1537 = vadd.f32 %v1383, %v1519
        $region71: #{tpu_custom_call.1} parent=39 // loop_footer
          %s1365 = sadd.s32 %s1363, 1
        $region72: #{tpu_custom_call.1} parent=39 // loop_footer_branch
          %1362 = sbr.rel target = $region68
        $region73: #{tpu_custom_call.1} parent=39 // loop_exit
          _
        %v1538 = vpack.c.bf16 %v1369, %v1368
        %v1539 = vpack.c.bf16 %v1371, %v1370
        %v1540 = vpack.c.bf16 %v1373, %v1372
        %v1541 = vpack.c.bf16 %v1375, %v1374
        %v1542 = vpack.c.bf16 %v1377, %v1376
        %v1543 = vpack.c.bf16 %v1379, %v1378
        %v1544 = vpack.c.bf16 %v1381, %v1380
        %v1545 = vpack.c.bf16 %v1383, %v1382
        %v1546 = vld [vmem:[#allocation10] sm:$0xf]
        %v1547 = vld [vmem:[#allocation10 + $0x4] sm:$0xf]
        %v1548 = vld [vmem:[#allocation10 + $0x8] sm:$0xf]
        %v1549 = vld [vmem:[#allocation10 + $0xc] sm:$0xf]
        %v1550 = vld [vmem:[#allocation10 + $0x10] sm:$0xf]
        %v1551 = vld [vmem:[#allocation10 + $0x14] sm:$0xf]
        %v1552 = vld [vmem:[#allocation10 + $0x18] sm:$0xf]
        %v1553 = vld [vmem:[#allocation10 + $0x1c] sm:$0xf]
        %v1554 = vld [vmem:[#allocation10 + $0x20] sm:$0xf]
        %v1555 = vld [vmem:[#allocation10 + $0x24] sm:$0xf]
        %v1556 = vld [vmem:[#allocation10 + $0x28] sm:$0xf]
        %v1557 = vld [vmem:[#allocation10 + $0x2c] sm:$0xf]
        %v1558 = vld [vmem:[#allocation10 + $0x30] sm:$0xf]
        %v1559 = vld [vmem:[#allocation10 + $0x34] sm:$0xf]
        %v1560 = vld [vmem:[#allocation10 + $0x38] sm:$0xf]
        %v1561 = vld [vmem:[#allocation10 + $0x3c] sm:$0xf]
        %v1562 = vld [vmem:[%s4] sm:$0x1]
        %v1564 = vlaneseq
        %v1565 = vshrl.u32 %v1564, 7
        %v1566 = vsub.s32 0, %v1565
        %v1567 = vrot.slane %v1562, %v1566
        %v1585 = vunpack.c.l.b16 %v1546
        %v1586 = vunpack.c.l.b16 %v1547
        %v1587 = vunpack.c.l.b16 %v1548
        %v1588 = vunpack.c.l.b16 %v1549
        %v1589 = vunpack.c.l.b16 %v1550
        %v1590 = vunpack.c.l.b16 %v1551
        %v1591 = vunpack.c.l.b16 %v1552
        %v1592 = vunpack.c.l.b16 %v1553
        %v1593 = vunpack.c.l.b16 %v1554
        %v1594 = vunpack.c.l.b16 %v1555
        %v1595 = vunpack.c.l.b16 %v1556
        %v1596 = vunpack.c.l.b16 %v1557
        %v1597 = vunpack.c.l.b16 %v1558
        %v1598 = vunpack.c.l.b16 %v1559
        %v1599 = vunpack.c.l.b16 %v1560
        %v1600 = vunpack.c.l.b16 %v1561
        %v1601 = vpack.c.b16 %v1586, %v1585
        %v1602 = vpack.c.b16 %v1588, %v1587
        %v1603 = vpack.c.b16 %v1590, %v1589
        %v1604 = vpack.c.b16 %v1592, %v1591
        %v1605 = vpack.c.b16 %v1594, %v1593
        %v1606 = vpack.c.b16 %v1596, %v1595
        %v1607 = vpack.c.b16 %v1598, %v1597
        %v1608 = vpack.c.b16 %v1600, %v1599
        %1617 = vmatprep.subr.bf16.mxu0 0
        %1618 = vmatpush1.bf16.msra.mxu0 %v1601
        %1619 = vmatprep.subr.bf16.mxu0 0
        %1620 = vmatpush1.bf16.msra.mxu0 %v1602
        %1621 = vmatprep.subr.bf16.mxu0 0
        %1622 = vmatpush1.bf16.msra.mxu0 %v1603
        %1623 = vmatprep.subr.bf16.mxu0 0
        %1624 = vmatpush1.bf16.msra.mxu0 %v1604
        %1625 = vmatprep.subr.bf16.mxu0 0
        %1626 = vmatpush1.bf16.msra.mxu0 %v1605
        %1627 = vmatprep.subr.bf16.mxu0 0
        %1628 = vmatpush1.bf16.msra.mxu0 %v1606
        %1629 = vmatprep.subr.bf16.mxu0 0
        %1630 = vmatpush1.bf16.msra.mxu0 %v1607
        %1631 = vmatprep.subr.bf16.mxu0 0
        %1632 = vmatpush1.bf16.msra.mxu0 %v1608
        %1633 = vmatprep.subr.bf16.mxu0 0
        %1634 = vmatpush1.bf16.msra.mxu0 0
        %1635 = vmatprep.subr.bf16.mxu0 0
        %1636 = vmatpush1.bf16.msra.mxu0 0
        %1637 = vmatprep.subr.bf16.mxu0 0
        %1638 = vmatpush1.bf16.msra.mxu0 0
        %1639 = vmatprep.subr.bf16.mxu0 0
        %1640 = vmatpush1.bf16.msra.mxu0 0
        %1641 = vmatprep.subr.bf16.mxu0 0
        %1642 = vmatpush1.bf16.msra.mxu0 0
        %1643 = vmatprep.subr.bf16.mxu0 0
        %1644 = vmatpush1.bf16.msra.mxu0 0
        %1645 = vmatprep.subr.bf16.mxu0 0
        %1646 = vmatpush1.bf16.msra.mxu0 0
        %1647 = vmatprep.subr.bf16.mxu0 0
        %1648 = vmatpush1.bf16.msra.mxu0 0
        %1649 = vmatprep.mubr.bf16.mxu0 0
        %1650 = vmatmul.mubr.bf16.gmra.mrb[0].mxu0 %v1538
        %v1651 = vpop.f32.mrb[0].mxu0
        %v1652 = vadd.f32 %v1567, %v1651
        %v1653 = vpop.f32.mrb[0].mxu0
        %v1654 = vpop.f32.mrb[0].mxu0
        %v1655 = vadd.f32 %v1567, %v1654
        %v1656 = vpop.f32.mrb[0].mxu0
        %1657 = vmatprep.mubr.bf16.mxu0 0
        %1658 = vmatmul.mubr.bf16.gmra.mrb[0].mxu0 %v1539
        %v1659 = vpop.f32.mrb[0].mxu0
        %v1660 = vadd.f32 %v1567, %v1659
        %v1661 = vpop.f32.mrb[0].mxu0
        %v1662 = vpop.f32.mrb[0].mxu0
        %v1663 = vadd.f32 %v1567, %v1662
        %v1664 = vpop.f32.mrb[0].mxu0
        %1665 = vmatprep.mubr.bf16.mxu0 0
        %1666 = vmatmul.mubr.bf16.gmra.mrb[0].mxu0 %v1540
        %v1667 = vpop.f32.mrb[0].mxu0
        %v1668 = vadd.f32 %v1567, %v1667
        %v1669 = vpop.f32.mrb[0].mxu0
        %v1670 = vpop.f32.mrb[0].mxu0
        %v1671 = vadd.f32 %v1567, %v1670
        %v1672 = vpop.f32.mrb[0].mxu0
        %1673 = vmatprep.mubr.bf16.mxu0 0
        %1674 = vmatmul.mubr.bf16.gmra.mrb[0].mxu0 %v1541
        %v1675 = vpop.f32.mrb[0].mxu0
        %v1676 = vadd.f32 %v1567, %v1675
        %v1677 = vpop.f32.mrb[0].mxu0
        %v1678 = vpop.f32.mrb[0].mxu0
        %v1679 = vadd.f32 %v1567, %v1678
        %v1680 = vpop.f32.mrb[0].mxu0
        %1681 = vmatprep.mubr.bf16.mxu0 0
        %1682 = vmatmul.mubr.bf16.gmra.mrb[0].mxu0 %v1542
        %v1683 = vpop.f32.mrb[0].mxu0
        %v1684 = vadd.f32 %v1567, %v1683
        %v1685 = vpop.f32.mrb[0].mxu0
        %v1686 = vpop.f32.mrb[0].mxu0
        %v1687 = vadd.f32 %v1567, %v1686
        %v1688 = vpop.f32.mrb[0].mxu0
        %1689 = vmatprep.mubr.bf16.mxu0 0
        %1690 = vmatmul.mubr.bf16.gmra.mrb[0].mxu0 %v1543
        %v1691 = vpop.f32.mrb[0].mxu0
        %v1692 = vadd.f32 %v1567, %v1691
        %v1693 = vpop.f32.mrb[0].mxu0
        %v1694 = vpop.f32.mrb[0].mxu0
        %v1695 = vadd.f32 %v1567, %v1694
        %v1696 = vpop.f32.mrb[0].mxu0
        %1697 = vmatprep.mubr.bf16.mxu0 0
        %1698 = vmatmul.mubr.bf16.gmra.mrb[0].mxu0 %v1544
        %v1699 = vpop.f32.mrb[0].mxu0
        %v1700 = vadd.f32 %v1567, %v1699
        %v1701 = vpop.f32.mrb[0].mxu0
        %v1702 = vpop.f32.mrb[0].mxu0
        %v1703 = vadd.f32 %v1567, %v1702
        %v1704 = vpop.f32.mrb[0].mxu0
        %1705 = vmatprep.mubr.bf16.mxu0 0
        %1706 = vmatmul.mubr.bf16.gmra.mrb[0].mxu0 %v1545
        %v1707 = vpop.f32.mrb[0].mxu0
        %v1708 = vadd.f32 %v1567, %v1707
        %v1709 = vpop.f32.mrb[0].mxu0
        %v1710 = vpop.f32.mrb[0].mxu0
        %v1711 = vadd.f32 %v1567, %v1710
        %v1712 = vpop.f32.mrb[0].mxu0
        %1713 = vdwg.mxu0
        %1714 = vst [vmem:[%s322] sm:$0xff] %v1652
        %1715 = vst [vmem:[%s322 + $0x8] sm:$0xff] %v1655
        %1716 = vst [vmem:[%s322 + $0x10] sm:$0xff] %v1660
        %1717 = vst [vmem:[%s322 + $0x18] sm:$0xff] %v1663
        %1718 = vst [vmem:[%s322 + $0x20] sm:$0xff] %v1668
        %1719 = vst [vmem:[%s322 + $0x28] sm:$0xff] %v1671
        %1720 = vst [vmem:[%s322 + $0x30] sm:$0xff] %v1676
        %1721 = vst [vmem:[%s322 + $0x38] sm:$0xff] %v1679
        %1722 = vst [vmem:[%s322 + $0x40] sm:$0xff] %v1684
        %1723 = vst [vmem:[%s322 + $0x48] sm:$0xff] %v1687
        %1724 = vst [vmem:[%s322 + $0x50] sm:$0xff] %v1692
        %1725 = vst [vmem:[%s322 + $0x58] sm:$0xff] %v1695
        %1726 = vst [vmem:[%s322 + $0x60] sm:$0xff] %v1700
        %1727 = vst [vmem:[%s322 + $0x68] sm:$0xff] %v1703
        %1728 = vst [vmem:[%s322 + $0x70] sm:$0xff] %v1708
        %1729 = vst [vmem:[%s322 + $0x78] sm:$0xff] %v1711
        %s1730 = sand.u32 %s162, 1
        %s1731 = scalar_lea.sflag [#allocation7], %s1730
        %s1732 = sand.u32 %s162, 1
        %s1733 = smul.addr %s1732, 128
        %s1734 = scalar_lea.vmem [#allocation11], %s1733
        %s1735 = sand.u32 %s190, 1
        %s1736 = scalar_lea.sflag [#allocation13], %s1735
        %s1737 = sand.u32 %s190, 1
        %s1738 = smul.addr %s1737, 256
        %s1739 = scalar_lea.vmem [#allocation12], %s1738
        // Predicated region
        $region74: #{tpu_custom_call.1} parent=39 // pred_check
          %p1740 = pneg %p172
        $region75: #{tpu_custom_call.1} parent=39 // pred_check_branch
          %1742 = sbr.rel (%p1740) target = $region77
        $region76: #{tpu_custom_call.1} parent=39 // pred_region
          %s1743 = smul.u32 16, %s33
          %s1745 = ssub.s32 2048, 2048
          %1746 = vsyncadd %s1731, %s1745
          %s1747 = smul.addr %s32, 32
          %s1748 = sadd.s32 %s1743, %s1747
          %s1749 = smul.addr %s1748, 128
          %s1750 = scalar_lea.hbm %s5, %s1749
          %s1751 = sshll.u32 %s1734, 4
          %s1752 = int_to_ptr.vmem [resolvable:$true] %s1751
          %1757 = dma.vmem_to_hbm [thread:$0]  %s1752, 2048, %s1750, %s1731, 128, 128, 8
        $region77: #{tpu_custom_call.1} parent=39 // pred_fallthru
          _
        // Predicated region
        $region78: #{tpu_custom_call.1} parent=39 // pred_check
          %p1758 = pneg %p200
        $region79: #{tpu_custom_call.1} parent=39 // pred_check_branch
          %1760 = sbr.rel (%p1758) target = $region81
        $region80: #{tpu_custom_call.1} parent=39 // pred_region
          %s1761 = smul.u32 16, %s33
          %s1763 = ssub.s32 4096, 4096
          %1764 = vsyncadd %s1736, %s1763
          %s1765 = smul.addr %s1761, 2
          %s1766 = smul.addr %s32, 64
          %s1767 = sadd.s32 %s1765, %s1766
          %s1768 = smul.addr %s1767, 128
          %s1769 = scalar_lea.hbm %s6, %s1768
          %s1770 = sshll.u32 %s1739, 4
          %s1771 = int_to_ptr.vmem [resolvable:$true] %s1770
          %1776 = dma.vmem_to_hbm [thread:$0]  %s1771, 4096, %s1769, %s1736, 256, 256, 16
        $region81: #{tpu_custom_call.1} parent=39 // pred_fallthru
          _
      $region40: #{tpu_custom_call.1} parent=5 // pred_fallthru
        _
      %p1777 = scmp.le.s32.totalorder 2, %s23
      // Predicated region
      $region82: #{tpu_custom_call.1} parent=5 // pred_check
        %p1778 = pneg %p1777
      $region83: #{tpu_custom_call.1} parent=5 // pred_check_branch
        %1780 = sbr.rel (%p1778) target = $region85
      $region84: #{tpu_custom_call.1} parent=5 // pred_region
        %s1781 = ssub.s32 %s23, 2
        // Predicated region
        $region86: #{tpu_custom_call.1} parent=84 // pred_check
          %p1782 = pneg %p178
        $region87: #{tpu_custom_call.1} parent=84 // pred_check_branch
          %1784 = sbr.rel (%p1782) target = $region89
        $region88: #{tpu_custom_call.1} parent=84 // pred_region
          %s1785 = sand.u32 %s163, 1
          %s1786 = scalar_lea.sflag [#allocation7], %s1785
          %s1787 = sand.u32 %s163, 1
          %s1788 = smul.addr %s1787, 128
          %s1789 = scalar_lea.vmem [#allocation11], %s1788
          %1790 = dma.done %s1786, 2048
        $region89: #{tpu_custom_call.1} parent=84 // pred_fallthru
          _
        // Predicated region
        $region90: #{tpu_custom_call.1} parent=84 // pred_check
          %p1791 = pneg %p206
        $region91: #{tpu_custom_call.1} parent=84 // pred_check_branch
          %1793 = sbr.rel (%p1791) target = $region93
        $region92: #{tpu_custom_call.1} parent=84 // pred_region
          %s1794 = sand.u32 %s191, 1
          %s1795 = scalar_lea.sflag [#allocation13], %s1794
          %s1796 = sand.u32 %s191, 1
          %s1797 = smul.addr %s1796, 256
          %s1798 = scalar_lea.vmem [#allocation12], %s1797
          %1799 = dma.done %s1795, 4096
        $region93: #{tpu_custom_call.1} parent=84 // pred_fallthru
          _
      $region85: #{tpu_custom_call.1} parent=5 // pred_fallthru
        _
    $region6: #{tpu_custom_call.1} parent=1 // loop_footer
      %s27 = sadd.s32 1, %s23
    $region7: #{tpu_custom_call.1} parent=1 // loop_footer_branch
      %22 = sbr.rel target = $region3
    $region8: #{tpu_custom_call.1} parent=1 // loop_exit
      _
    %1800 = vsyncpa [#allocation6], 1
    %s1801 = scalar_lea.sflag [#allocation6], 1
    %1802 = vsyncpa %s1801, 1
    %1803 = vsyncpa [#allocation9], 1
    %1804 = vsyncpa [#allocation7], 1
    %s1805 = scalar_lea.sflag [#allocation7], 1
    %1806 = vsyncpa %s1805, 1
    %1807 = vsyncpa [#allocation13], 1
    %s1808 = scalar_lea.sflag [#allocation13], 1
    %1809 = vsyncpa %s1808, 1

</llo_original>
